<compile_context>
chip_gen: v7x
topology: tpu7x:2x2x1
jax: 0.10.0
libtpu: 0.0.40
codegen_flags: <defaults>
</compile_context>

<pallas_src>
import math

import jax
import jax.numpy as jnp
from jax.experimental import pallas as pl
from jax.experimental.pallas import tpu as pltpu

BLOCK_SIZE = 256
N_EMBED = 384
DROP_RATE = 0.2  # unused in eval-mode forward

# Safe scoped-VMEM limit on every generation (v5e/v6e/v7x); the fused kernel
# uses well under 4 MiB.
_VMEM_LIMIT = 32 * 1024 * 1024


# ---------------------------------------------------------------------------
# Fused kernel: QKV projection + causal attention + softmax for one batch
# element (full sequence resident in VMEM).
# ---------------------------------------------------------------------------
def _head_kernel(x_ref, w_ref, o_ref):
    # x_ref: (1, T, C)   w_ref: (C, 3H) packed [q*scale | k | v]   o_ref: (1, T, H)
    T = x_ref.shape[1]
    H = o_ref.shape[-1]
    cdt = x_ref.dtype  # dtype fed to the MXU (accumulation is always f32)

    x = x_ref[0]      # (T, C)
    w = w_ref[...]    # (C, 3H)

    # Fused QKV projection. The 1/sqrt(H) attention scale is folded into the
    # q columns of w upstream. Result stays in VMEM; no HBM round trip.
    qkv = jnp.dot(x, w, preferred_element_type=jnp.float32).astype(cdt)  # (T, 3H)
    q = qkv[:, 0 * H:1 * H]
    k = qkv[:, 1 * H:2 * H]
    v = qkv[:, 2 * H:3 * H]

    # scores = q @ k^T with the transpose folded into the contraction dims
    # (no explicit XLU transpose / extra copy of k).
    s = jax.lax.dot_general(
        q, k, (((1,), (1,)), ((), ())), preferred_element_type=jnp.float32
    )  # (T, T) f32

    # Causal mask (tile covers the whole sequence, local coordinates suffice).
    # A finite large-negative value is used instead of -inf: exp() underflows
    # to exactly 0 for masked entries (identical result to the reference) and
    # there is no inf/NaN hazard.
    row = jax.lax.broadcasted_iota(jnp.int32, (T, T), 0)
    col = jax.lax.broadcasted_iota(jnp.int32, (T, T), 1)
    s = jnp.where(col <= row, s, -1e30)

    # Single-pass numerically stable softmax (full key row is resident).
    m = jnp.max(s, axis=-1, keepdims=True)
    p = jnp.exp(s - m)
    attn = p * (1.0 / jnp.sum(p, axis=-1, keepdims=True))

    # Dropout: identity (eval mode).
    o_ref[0] = jnp.dot(
        attn.astype(cdt), v, preferred_element_type=jnp.float32
    ).astype(o_ref.dtype)


def head_forward(x, wk, wq, wv, *, compute_dtype=jnp.float32):
    """x: (B, T, C); wk/wq/wv: (C, H)  ->  (B, T, H).

    compute_dtype is the dtype fed to the MXU (accumulation is always f32).
    jnp.bfloat16 is recommended on v6e/v7x for ~2-4x matmul throughput and
    half the DMA volume; the default stays float32 to match the float32
    PyTorch reference tightly.
    """
    B, T, C = x.shape
    H = wk.shape[-1]
    scale = 1.0 / math.sqrt(H)

    # Pack [q*scale | k | v] into a single (C, 3H) weight so the projection is
    # one matmul (one MXU weight-push sequence instead of three).
    w_qkv = jnp.concatenate([wq * scale, wk, wv], axis=-1).astype(compute_dtype)
    xc = x.astype(compute_dtype)

    return pl.pallas_call(
        _head_kernel,
        out_shape=jax.ShapeDtypeStruct((B, T, H), x.dtype),
        grid_spec=pltpu.PrefetchScalarGridSpec(
            num_scalar_prefetch=0,
            grid=(B,),
            in_specs=[
                pl.BlockSpec((1, T, C), lambda b: (b, 0, 0)),
                # Constant block index -> weight is DMA'd once and stays resident.
                pl.BlockSpec((C, 3 * H), lambda b: (0, 0)),
            ],
            out_specs=pl.BlockSpec((1, T, H), lambda b: (b, 0, 0)),
        ),
        compiler_params=pltpu.CompilerParams(
            # Batch axis parallel: on v7x the 2 TensorCores each take a batch.
            dimension_semantics=("parallel",),
            vmem_limit_bytes=_VMEM_LIMIT,
        ),
    )(xc, w_qkv)


def head_reference(x, wk, wq, wv):
    """Pure-JAX reference mirroring the PyTorch forward (eval mode)."""
    B, T, C = x.shape
    H = wk.shape[-1]
    k = x @ wk
    q = x @ wq
    v = x @ wv
    w = (q @ jnp.swapaxes(k, -2, -1)) / (H ** 0.5)
    mask = jnp.tril(jnp.ones((T, T), dtype=bool))
    w = jnp.where(mask, w, -jnp.inf)
    w = jax.nn.softmax(w, axis=-1)
    return w @ v


if __name__ == "__main__":
    # T = BLOCK_SIZE = 256 (the module's max_block_size), C = N_EMBED = 384.
    B, T, C = 2, BLOCK_SIZE, N_EMBED
    head_size = 64

    key = jax.random.PRNGKey(0)
    kx, kk, kq, kv = jax.random.split(key, 4)

    x = jax.random.normal(kx, (B, T, C), dtype=jnp.float32)
    # Deterministic init matching nn.Linear(N_EMBED, head_size, bias=False):
    # torch weight shape is (head_size, N_EMBED); we store its transpose (C, H).
    bound = 1.0 / math.sqrt(N_EMBED)
    wk = jax.random.uniform(kk, (C, head_size), jnp.float32, -bound, bound)
    wq = jax.random.uniform(kq, (C, head_size), jnp.float32, -bound, bound)
    wv = jax.random.uniform(kv, (C, head_size), jnp.float32, -bound, bound)

    out = jax.block_until_ready(head_forward(x, wk, wq, wv))
    ref = head_reference(x, wk, wq, wv)

    assert out.shape == (B, T, head_size)
    # Pure f32 path (f32 MXU inputs, f32 accumulation, exact softmax divide),
    # so agreement with the pure-JAX reference is ~1e-5; 1e-3 leaves margin.
    assert jnp.allclose(out, ref, atol=1e-3, rtol=1e-3), "mismatch vs reference"

    print("KERNEL_OK")
</pallas_src>

<mosaic_0001>
module attributes {stable_mosaic.version = 11 : i64} {
  func.func @_head_kernel(%arg0: i32, %arg1: memref<1x256x384xf32, #tpu.memory_space<vmem>>, %arg2: memref<384x192xf32, #tpu.memory_space<vmem>>, %arg3: memref<1x256x64xf32, #tpu.memory_space<vmem>>) attributes {dimension_semantics = [#tpu.dimension_semantics<parallel>], iteration_bounds = array<i64: 2>, scalar_prefetch = 0 : i64, scratch_operands = 0 : i64, tpu.core_type = #tpu.core_type<tc>, window_params = [{transform_indices = @transform_0, window_bounds = array<i64: 1, 256, 384>}, {pipeline_mode = #tpu.pipeline_mode<synchronous>, transform_indices = @transform_1, window_bounds = array<i64: 384, 192>}, {transform_indices = @transform_2, window_bounds = array<i64: 1, 256, 64>}]} {
    %c0 = arith.constant 0 : index
    %c0_0 = arith.constant 0 : index
    %c0_1 = arith.constant 0 : index
    %0 = vector.load %arg1[%c0, %c0_0, %c0_1] : memref<1x256x384xf32, #tpu.memory_space<vmem>>, vector<1x256x384xf32>
    %1 = vector.shape_cast %0 : vector<1x256x384xf32> to vector<256x384xf32>
    %c0_2 = arith.constant 0 : index
    %c0_3 = arith.constant 0 : index
    %2 = vector.load %arg2[%c0_2, %c0_3] : memref<384x192xf32, #tpu.memory_space<vmem>>, vector<384x192xf32>
    %cst = arith.constant dense<0.000000e+00> : vector<256x192xf32>
    %3 = tpu.matmul %1, %2, %cst {dimension_numbers = #tpu.dot_dimension_numbers<[1], [0], [0], [1], [0, 0, 1, 1], [], []>} : vector<256x384xf32>, vector<384x192xf32>, vector<256x192xf32> -> vector<256x192xf32>
    %4 = vector.extract_strided_slice %3 {offsets = [0, 0], sizes = [256, 64], strides = [1, 1]} : vector<256x192xf32> to vector<256x64xf32>
    %5 = vector.extract_strided_slice %3 {offsets = [0, 64], sizes = [256, 64], strides = [1, 1]} : vector<256x192xf32> to vector<256x64xf32>
    %6 = vector.extract_strided_slice %3 {offsets = [0, 128], sizes = [256, 64], strides = [1, 1]} : vector<256x192xf32> to vector<256x64xf32>
    %cst_4 = arith.constant dense<0.000000e+00> : vector<256x256xf32>
    %7 = tpu.matmul %4, %5, %cst_4 {dimension_numbers = #tpu.dot_dimension_numbers<[1], [1], [0], [0], [0, 0, 1, 0], [], []>} : vector<256x64xf32>, vector<256x64xf32>, vector<256x256xf32> -> vector<256x256xf32>
    %8 = tpu.iota {dimensions = array<i32: 0>} : vector<256x256xi32>
    %9 = tpu.iota {dimensions = array<i32: 1>} : vector<256x256xi32>
    %10 = arith.cmpi sle, %9, %8 : vector<256x256xi32>
    %cst_5 = arith.constant -1.000000e+30 : f32
    %11 = vector.broadcast %cst_5 : f32 to vector<256x256xf32>
    %12 = arith.select %10, %7, %11 : vector<256x256xi1>, vector<256x256xf32>
    %cst_6 = arith.constant dense<0xFF800000> : vector<256xf32>
    %13 = vector.multi_reduction <maximumf>, %12, %cst_6 [1] : vector<256x256xf32> to vector<256xf32>
    %14 = vector.shape_cast %13 : vector<256xf32> to vector<256x1xf32>
    %15 = vector.broadcast %14 : vector<256x1xf32> to vector<256x256xf32>
    %16 = arith.subf %12, %15 : vector<256x256xf32>
    %17 = math.exp %16 : vector<256x256xf32>
    %cst_7 = arith.constant dense<0.000000e+00> : vector<256xf32>
    %18 = vector.multi_reduction <add>, %17, %cst_7 [1] : vector<256x256xf32> to vector<256xf32>
    %19 = vector.shape_cast %18 : vector<256xf32> to vector<256x1xf32>
    %cst_8 = arith.constant 1.000000e+00 : f32
    %20 = vector.broadcast %cst_8 : f32 to vector<256x1xf32>
    %21 = arith.divf %20, %19 : vector<256x1xf32>
    %22 = vector.broadcast %21 : vector<256x1xf32> to vector<256x256xf32>
    %23 = arith.mulf %17, %22 : vector<256x256xf32>
    %cst_9 = arith.constant dense<0.000000e+00> : vector<256x64xf32>
    %24 = tpu.matmul %23, %6, %cst_9 {dimension_numbers = #tpu.dot_dimension_numbers<[1], [0], [0], [1], [0, 0, 1, 1], [], []>} : vector<256x256xf32>, vector<256x64xf32>, vector<256x64xf32> -> vector<256x64xf32>
    %c0_10 = arith.constant 0 : index
    %c0_11 = arith.constant 0 : index
    %c0_12 = arith.constant 0 : index
    %25 = vector.load %arg3[%c0_10, %c0_11, %c0_12] : memref<1x256x64xf32, #tpu.memory_space<vmem>>, vector<1x256x64xf32>
    %26 = vector.shape_cast %25 : vector<1x256x64xf32> to vector<256x64xf32>
    %27 = vector.shape_cast %24 : vector<256x64xf32> to vector<1x256x64xf32>
    tpu.vector_store %arg3[%c0_10, %c0_11, %c0_12], %27 {strides = array<i32>} : memref<1x256x64xf32, #tpu.memory_space<vmem>>, vector<1x256x64xf32>,
    return
  }
  func.func @transform_0(%arg0: i32) -> (i32, i32, i32) {
    %c0_i32 = arith.constant 0 : i32
    %c0_i32_0 = arith.constant 0 : i32
    %c0_i32_1 = arith.constant 0 : i32
    return %arg0, %c0_i32, %c0_i32_0 : i32, i32, i32
  }
  func.func @transform_1(%arg0: i32) -> (i32, i32) {
    %c0_i32 = arith.constant 0 : i32
    %c0_i32_0 = arith.constant 0 : i32
    %c0_i32_1 = arith.constant 0 : i32
    return %c0_i32, %c0_i32_0 : i32, i32
  }
  func.func @transform_2(%arg0: i32) -> (i32, i32, i32) {
    %c0_i32 = arith.constant 0 : i32
    %c0_i32_0 = arith.constant 0 : i32
    %c0_i32_1 = arith.constant 0 : i32
    return %arg0, %c0_i32, %c0_i32_0 : i32, i32, i32
  }
}

</mosaic_0001>

<llo_original>
// kernel: tpu_custom_call.1
$region0: #{tpu_custom_call.1}
  #allocation0 [shape = 'u32[]', space=smem, size = 0x4, offset = 0x4, fixed_abs, tag = 'smem constant byte address 0x4 - core index']
  #allocation1 [shape = 'u32[144,128]{1,0:T(1,128)}', space=vmem, size = 0x12000, scoped, tag = 'internal scratch']
  %s0 = inlined_call_operand.hbm [shape: f32[2,256,384], index: 0, kind: input, shape index: {}]
  %s1 = inlined_call_operand.vmem [shape: f32[384,192], index: 1, kind: input, shape index: {}]
  %s2 = inlined_call_operand.vmem [shape: f32[2,256,64], index: 2, kind: output, shape index: {}]
  %s3 = sld [smem:[#allocation0]]
  $region45: #{tpu_custom_call.1} parent=0
    _
  %s5 = ssub.s32 1, %s3
  %s6 = scalar_select 0, %s5, %s3
  $region1: #{tpu_custom_call.1} parent=0
    #allocation2 [shape = 'u8[786432]{0}', space=vmem, size = 0xc0000, scoped, tag = 'input window, operand 0']
    #allocation3 [shape = 's32[2]{0}', space=sflag, size = 0x8, scoped, tag = 'scoped memory for tpu_custom_call.1']
    %7 = vsyncpa [#allocation3], 0
    %s8 = scalar_lea.sflag [#allocation3], 1
    %9 = vsyncpa %s8, 0
    loop: start=0, step=1, limit=4
    $region2: #{tpu_custom_call.1} parent=1 // loop_pre_header
      _
    $region3: #{tpu_custom_call.1} parent=1 // loop_header
      %s11 = sphi 0, %s15
      %p12 = scmp.ge.s32.totalorder %s11, 4
      %s21 = sphi 0, %s23
      %s24 = sphi 0, %s21
      %s25 = sphi 0, %s24
      %s41 = sphi 0, %s25
      %s45 = sphi 0, %s45
      %s47 = sphi 0, %s45
      %s48 = sphi 0, %s47
      %s62 = sphi 0, %s48
      %s68 = sphi 0, %s70
      %s71 = sphi 0, %s68
      %s72 = sphi 0, %s71
      %s88 = sphi 0, %s72
    $region4: #{tpu_custom_call.1} parent=1 // loop_header_branch
      %14 = sbr.rel (%p12) target = $region8
    $region5: #{tpu_custom_call.1} parent=1 // loop_body
      %s16 = ssub.s32 %s11, 1
      %s17 = ssub.s32 %s11, 2
      %s18 = sadd.s32 %s11, 1
      %s19 = ssub.s32 %s11, %s18
      %p20 = scmp.eq.s32.totalorder %s19, 0
      %s22 = sadd.s32 %s21, 1
      %s23 = scalar_select %p20, %s21, %s22
      %p26 = pneg %p20
      %p27 = scmp.eq.s32.totalorder %s11, 1
      %p28 = por %p26, %p27
      %p29 = scmp.ne.s32.totalorder %s21, %s24
      %p30 = scmp.eq.s32.totalorder %s11, 0
      %p31 = por %p29, %p30
      %p32 = scmp.ne.s32.totalorder %s21, %s24
      %p33 = scmp.eq.s32.totalorder %s16, 1
      %p34 = por %p32, %p33
      %p35 = scmp.ne.s32.totalorder %s24, %s25
      %p36 = scmp.eq.s32.totalorder %s16, 0
      %p37 = por %p35, %p36
      %p38 = scmp.ne.s32.totalorder %s24, %s25
      %p39 = scmp.eq.s32.totalorder %s17, 1
      %p40 = por %p38, %p39
      %p42 = scmp.ne.s32.totalorder %s25, %s41
      %p43 = scmp.eq.s32.totalorder %s17, 0
      %p44 = por %p42, %p43
      %s46 = sadd.s32 %s45, 1
      %p49 = scmp.eq.s32.totalorder %s11, 1
      %p50 = scmp.ne.s32.totalorder %s45, %s47
      %p51 = scmp.eq.s32.totalorder %s11, 0
      %p52 = por %p50, %p51
      %p53 = scmp.ne.s32.totalorder %s45, %s47
      %p54 = scmp.eq.s32.totalorder %s16, 1
      %p55 = por %p53, %p54
      %p56 = scmp.ne.s32.totalorder %s47, %s48
      %p57 = scmp.eq.s32.totalorder %s16, 0
      %p58 = por %p56, %p57
      %p59 = scmp.ne.s32.totalorder %s47, %s48
      %p60 = scmp.eq.s32.totalorder %s17, 1
      %p61 = por %p59, %p60
      %p63 = scmp.ne.s32.totalorder %s48, %s62
      %p64 = scmp.eq.s32.totalorder %s17, 0
      %p65 = por %p63, %p64
      %s66 = ssub.s32 %s11, %s18
      %p67 = scmp.eq.s32.totalorder %s66, 0
      %s69 = sadd.s32 %s68, 1
      %s70 = scalar_select %p67, %s68, %s69
      %p73 = pneg %p67
      %p74 = scmp.eq.s32.totalorder %s11, 1
      %p75 = por %p73, %p74
      %p76 = scmp.ne.s32.totalorder %s68, %s71
      %p77 = scmp.eq.s32.totalorder %s11, 0
      %p78 = por %p76, %p77
      %p79 = scmp.ne.s32.totalorder %s68, %s71
      %p80 = scmp.eq.s32.totalorder %s16, 1
      %p81 = por %p79, %p80
      %p82 = scmp.ne.s32.totalorder %s71, %s72
      %p83 = scmp.eq.s32.totalorder %s16, 0
      %p84 = por %p82, %p83
      %p85 = scmp.ne.s32.totalorder %s71, %s72
      %p86 = scmp.eq.s32.totalorder %s17, 1
      %p87 = por %p85, %p86
      %p89 = scmp.ne.s32.totalorder %s72, %s88
      %p90 = scmp.eq.s32.totalorder %s17, 0
      %p91 = por %p89, %p90
      %p92 = scmp.le.s32.totalorder 1, %s11
      %p93 = scmp.lt.s32.totalorder %s11, 3
      %p94 = pnand %p92, %p93
      %p95 = pneg %p94
      // Predicated region
      $region9: #{tpu_custom_call.1} parent=5 // pred_check
        _
      $region10: #{tpu_custom_call.1} parent=5 // pred_check_branch
        %97 = sbr.rel (%p94) target = $region12
      $region11: #{tpu_custom_call.1} parent=5 // pred_region
        %s98 = ssub.s32 %s11, 1
        // Predicated region
        $region13: #{tpu_custom_call.1} parent=11 // pred_check
          %p99 = pneg %p58
        $region14: #{tpu_custom_call.1} parent=11 // pred_check_branch
          %101 = sbr.rel (%p99) target = $region16
        $region15: #{tpu_custom_call.1} parent=11 // pred_region
          _
        $region16: #{tpu_custom_call.1} parent=11 // pred_fallthru
          _
      $region12: #{tpu_custom_call.1} parent=5 // pred_fallthru
        _
      %p102 = scmp.lt.s32.totalorder %s11, 2
      // Predicated region
      $region17: #{tpu_custom_call.1} parent=5 // pred_check
        %p103 = pneg %p102
      $region18: #{tpu_custom_call.1} parent=5 // pred_check_branch
        %105 = sbr.rel (%p103) target = $region20
      $region19: #{tpu_custom_call.1} parent=5 // pred_region
        // Predicated region
        $region21: #{tpu_custom_call.1} parent=19 // pred_check
          %p106 = pneg %p31
        $region22: #{tpu_custom_call.1} parent=19 // pred_check_branch
          %108 = sbr.rel (%p106) target = $region24
        $region23: #{tpu_custom_call.1} parent=19 // pred_region
          %s109 = sand.u32 %s21, 1
          %s110 = scalar_lea.sflag [#allocation3], %s109
          %s111 = sand.u32 %s21, 1
          %s112 = smul.addr %s111, 768
          %s113 = scalar_lea.vmem [#allocation2], %s112
          %s115 = ssub.s32 12288, 12288
          %116 = vsyncadd %s110, %s115
          %s117 = smul.addr %s11, 96
          %s118 = smul.addr %s117, 128
          %s119 = scalar_lea.hbm %s0, %s118
          %s120 = sshll.u32 %s113, 4
          %s121 = int_to_ptr.vmem [resolvable:$true] %s120
          %126 = dma.hbm_to_vmem [thread:$0]  %s119, 12288, %s121, %s110, 384, 384, 24
        $region24: #{tpu_custom_call.1} parent=19 // pred_fallthru
          _
      $region20: #{tpu_custom_call.1} parent=5 // pred_fallthru
        _
      %p127 = scmp.le.s32.totalorder 1, %s11
      %p128 = scmp.lt.s32.totalorder %s11, 3
      %p129 = pnand %p127, %p128
      %p130 = pneg %p129
      // Predicated region
      $region25: #{tpu_custom_call.1} parent=5 // pred_check
        _
      $region26: #{tpu_custom_call.1} parent=5 // pred_check_branch
        %132 = sbr.rel (%p129) target = $region28
      $region27: #{tpu_custom_call.1} parent=5 // pred_region
        %s133 = ssub.s32 %s11, 1
        %s134 = sand.u32 %s24, 1
        %s135 = scalar_lea.sflag [#allocation3], %s134
        %s136 = sand.u32 %s24, 1
        %s137 = smul.addr %s136, 768
        %s138 = scalar_lea.vmem [#allocation2], %s137
        // Predicated region
        $region29: #{tpu_custom_call.1} parent=27 // pred_check
          %p139 = pneg %p37
        $region30: #{tpu_custom_call.1} parent=27 // pred_check_branch
          %141 = sbr.rel (%p139) target = $region32
        $region31: #{tpu_custom_call.1} parent=27 // pred_region
          %142 = dma.done %s135, 12288
        $region32: #{tpu_custom_call.1} parent=27 // pred_fallthru
          _
        %s143 = sand.u32 %s24, 1
        %s144 = scalar_lea.sflag [#allocation3], %s143
        %s145 = sand.u32 %s24, 1
        %s146 = smul.addr %s145, 768
        %s147 = scalar_lea.vmem [#allocation2], %s146
        %p148 = pneg %p37
        %p149 = pneg %p34
        %p150 = pneg %p58
        %p151 = pneg %p55
        %p152 = pneg %p84
        %p153 = pneg %p81
        %p154 = scmp.lt.s32.totalorder %s16, 1
        %s155 = scalar_select %p154, %s16, 1
        %s156 = smul.addr %s155, 32
        %s157 = smul.addr %s156, 8
        %s158 = scalar_lea.vmem %s2, %s157
        %p159 = scmp.lt.s32.totalorder %s16, 1
        %s160 = scalar_select %p159, %s16, 1
        %s161 = smul.addr %s160, 32
        %s162 = smul.addr %s161, 8
        %s163 = scalar_lea.vmem %s2, %s162
        %v164 = vld [vmem:[%s138] sm:$0xff]
        %v165 = vld [vmem:[%s138 + $0x8] sm:$0xff]
        %v166 = vld [vmem:[%s138 + $0x10] sm:$0xff]
        %v167 = vld [vmem:[%s138 + $0x18] sm:$0xff]
        %v168 = vld [vmem:[%s138 + $0x20] sm:$0xff]
        %v169 = vld [vmem:[%s138 + $0x28] sm:$0xff]
        %v170 = vld [vmem:[%s138 + $0x30] sm:$0xff]
        %v171 = vld [vmem:[%s138 + $0x38] sm:$0xff]
        %v172 = vld [vmem:[%s138 + $0x40] sm:$0xff]
        %v173 = vld [vmem:[%s138 + $0x48] sm:$0xff]
        %v174 = vld [vmem:[%s138 + $0x50] sm:$0xff]
        %v175 = vld [vmem:[%s138 + $0x58] sm:$0xff]
        %v176 = vld [vmem:[%s138 + $0x60] sm:$0xff]
        %v177 = vld [vmem:[%s138 + $0x68] sm:$0xff]
        %v178 = vld [vmem:[%s138 + $0x70] sm:$0xff]
        %v179 = vld [vmem:[%s138 + $0x78] sm:$0xff]
        %v180 = vld [vmem:[%s138 + $0x80] sm:$0xff]
        %v181 = vld [vmem:[%s138 + $0x88] sm:$0xff]
        %v182 = vld [vmem:[%s138 + $0x90] sm:$0xff]
        %v183 = vld [vmem:[%s138 + $0x98] sm:$0xff]
        %v184 = vld [vmem:[%s138 + $0xa0] sm:$0xff]
        %v185 = vld [vmem:[%s138 + $0xa8] sm:$0xff]
        %v186 = vld [vmem:[%s138 + $0xb0] sm:$0xff]
        %v187 = vld [vmem:[%s138 + $0xb8] sm:$0xff]
        %v188 = vld [vmem:[%s138 + $0xc0] sm:$0xff]
        %v189 = vld [vmem:[%s138 + $0xc8] sm:$0xff]
        %v190 = vld [vmem:[%s138 + $0xd0] sm:$0xff]
        %v191 = vld [vmem:[%s138 + $0xd8] sm:$0xff]
        %v192 = vld [vmem:[%s138 + $0xe0] sm:$0xff]
        %v193 = vld [vmem:[%s138 + $0xe8] sm:$0xff]
        %v194 = vld [vmem:[%s138 + $0xf0] sm:$0xff]
        %v195 = vld [vmem:[%s138 + $0xf8] sm:$0xff]
        %v196 = vld [vmem:[%s138 + $0x100] sm:$0xff]
        %v197 = vld [vmem:[%s138 + $0x108] sm:$0xff]
        %v198 = vld [vmem:[%s138 + $0x110] sm:$0xff]
        %v199 = vld [vmem:[%s138 + $0x118] sm:$0xff]
        %v200 = vld [vmem:[%s138 + $0x120] sm:$0xff]
        %v201 = vld [vmem:[%s138 + $0x128] sm:$0xff]
        %v202 = vld [vmem:[%s138 + $0x130] sm:$0xff]
        %v203 = vld [vmem:[%s138 + $0x138] sm:$0xff]
        %v204 = vld [vmem:[%s138 + $0x140] sm:$0xff]
        %v205 = vld [vmem:[%s138 + $0x148] sm:$0xff]
        %v206 = vld [vmem:[%s138 + $0x150] sm:$0xff]
        %v207 = vld [vmem:[%s138 + $0x158] sm:$0xff]
        %v208 = vld [vmem:[%s138 + $0x160] sm:$0xff]
        %v209 = vld [vmem:[%s138 + $0x168] sm:$0xff]
        %v210 = vld [vmem:[%s138 + $0x170] sm:$0xff]
        %v211 = vld [vmem:[%s138 + $0x178] sm:$0xff]
        %v212 = vld [vmem:[%s138 + $0x180] sm:$0xff]
        %v213 = vld [vmem:[%s138 + $0x188] sm:$0xff]
        %v214 = vld [vmem:[%s138 + $0x190] sm:$0xff]
        %v215 = vld [vmem:[%s138 + $0x198] sm:$0xff]
        %v216 = vld [vmem:[%s138 + $0x1a0] sm:$0xff]
        %v217 = vld [vmem:[%s138 + $0x1a8] sm:$0xff]
        %v218 = vld [vmem:[%s138 + $0x1b0] sm:$0xff]
        %v219 = vld [vmem:[%s138 + $0x1b8] sm:$0xff]
        %v220 = vld [vmem:[%s138 + $0x1c0] sm:$0xff]
        %v221 = vld [vmem:[%s138 + $0x1c8] sm:$0xff]
        %v222 = vld [vmem:[%s138 + $0x1d0] sm:$0xff]
        %v223 = vld [vmem:[%s138 + $0x1d8] sm:$0xff]
        %v224 = vld [vmem:[%s138 + $0x1e0] sm:$0xff]
        %v225 = vld [vmem:[%s138 + $0x1e8] sm:$0xff]
        %v226 = vld [vmem:[%s138 + $0x1f0] sm:$0xff]
        %v227 = vld [vmem:[%s138 + $0x1f8] sm:$0xff]
        %v228 = vld [vmem:[%s138 + $0x200] sm:$0xff]
        %v229 = vld [vmem:[%s138 + $0x208] sm:$0xff]
        %v230 = vld [vmem:[%s138 + $0x210] sm:$0xff]
        %v231 = vld [vmem:[%s138 + $0x218] sm:$0xff]
        %v232 = vld [vmem:[%s138 + $0x220] sm:$0xff]
        %v233 = vld [vmem:[%s138 + $0x228] sm:$0xff]
        %v234 = vld [vmem:[%s138 + $0x230] sm:$0xff]
        %v235 = vld [vmem:[%s138 + $0x238] sm:$0xff]
        %v236 = vld [vmem:[%s138 + $0x240] sm:$0xff]
        %v237 = vld [vmem:[%s138 + $0x248] sm:$0xff]
        %v238 = vld [vmem:[%s138 + $0x250] sm:$0xff]
        %v239 = vld [vmem:[%s138 + $0x258] sm:$0xff]
        %v240 = vld [vmem:[%s138 + $0x260] sm:$0xff]
        %v241 = vld [vmem:[%s138 + $0x268] sm:$0xff]
        %v242 = vld [vmem:[%s138 + $0x270] sm:$0xff]
        %v243 = vld [vmem:[%s138 + $0x278] sm:$0xff]
        %v244 = vld [vmem:[%s138 + $0x280] sm:$0xff]
        %v245 = vld [vmem:[%s138 + $0x288] sm:$0xff]
        %v246 = vld [vmem:[%s138 + $0x290] sm:$0xff]
        %v247 = vld [vmem:[%s138 + $0x298] sm:$0xff]
        %v248 = vld [vmem:[%s138 + $0x2a0] sm:$0xff]
        %v249 = vld [vmem:[%s138 + $0x2a8] sm:$0xff]
        %v250 = vld [vmem:[%s138 + $0x2b0] sm:$0xff]
        %v251 = vld [vmem:[%s138 + $0x2b8] sm:$0xff]
        %v252 = vld [vmem:[%s138 + $0x2c0] sm:$0xff]
        %v253 = vld [vmem:[%s138 + $0x2c8] sm:$0xff]
        %v254 = vld [vmem:[%s138 + $0x2d0] sm:$0xff]
        %v255 = vld [vmem:[%s138 + $0x2d8] sm:$0xff]
        %v256 = vld [vmem:[%s138 + $0x2e0] sm:$0xff]
        %v257 = vld [vmem:[%s138 + $0x2e8] sm:$0xff]
        %v258 = vld [vmem:[%s138 + $0x2f0] sm:$0xff]
        %v259 = vld [vmem:[%s138 + $0x2f8] sm:$0xff]
        %v260 = vld [vmem:[%s1] sm:$0xff]
        %v261 = vld [vmem:[%s1 + $0x8] sm:$0xff]
        %v262 = vld [vmem:[%s1 + $0x10] sm:$0xff]
        %v263 = vld [vmem:[%s1 + $0x18] sm:$0xff]
        %v264 = vld [vmem:[%s1 + $0x20] sm:$0xff]
        %v265 = vld [vmem:[%s1 + $0x28] sm:$0xff]
        %v266 = vld [vmem:[%s1 + $0x30] sm:$0xff]
        %v267 = vld [vmem:[%s1 + $0x38] sm:$0xff]
        %v268 = vld [vmem:[%s1 + $0x40] sm:$0xff]
        %v269 = vld [vmem:[%s1 + $0x48] sm:$0xff]
        %v270 = vld [vmem:[%s1 + $0x50] sm:$0xff]
        %v271 = vld [vmem:[%s1 + $0x58] sm:$0xff]
        %v272 = vld [vmem:[%s1 + $0x60] sm:$0xff]
        %v273 = vld [vmem:[%s1 + $0x68] sm:$0xff]
        %v274 = vld [vmem:[%s1 + $0x70] sm:$0xff]
        %v275 = vld [vmem:[%s1 + $0x78] sm:$0xff]
        %v276 = vld [vmem:[%s1 + $0x80] sm:$0xff]
        %v277 = vld [vmem:[%s1 + $0x88] sm:$0xff]
        %v278 = vld [vmem:[%s1 + $0x90] sm:$0xff]
        %v279 = vld [vmem:[%s1 + $0x98] sm:$0xff]
        %v280 = vld [vmem:[%s1 + $0xa0] sm:$0xff]
        %v281 = vld [vmem:[%s1 + $0xa8] sm:$0xff]
        %v282 = vld [vmem:[%s1 + $0xb0] sm:$0xff]
        %v283 = vld [vmem:[%s1 + $0xb8] sm:$0xff]
        %v284 = vld [vmem:[%s1 + $0xc0] sm:$0xff]
        %v285 = vld [vmem:[%s1 + $0xc8] sm:$0xff]
        %v286 = vld [vmem:[%s1 + $0xd0] sm:$0xff]
        %v287 = vld [vmem:[%s1 + $0xd8] sm:$0xff]
        %v288 = vld [vmem:[%s1 + $0xe0] sm:$0xff]
        %v289 = vld [vmem:[%s1 + $0xe8] sm:$0xff]
        %v290 = vld [vmem:[%s1 + $0xf0] sm:$0xff]
        %v291 = vld [vmem:[%s1 + $0xf8] sm:$0xff]
        %v292 = vld [vmem:[%s1 + $0x100] sm:$0xff]
        %v293 = vld [vmem:[%s1 + $0x108] sm:$0xff]
        %v294 = vld [vmem:[%s1 + $0x110] sm:$0xff]
        %v295 = vld [vmem:[%s1 + $0x118] sm:$0xff]
        %v296 = vld [vmem:[%s1 + $0x120] sm:$0xff]
        %v297 = vld [vmem:[%s1 + $0x128] sm:$0xff]
        %v298 = vld [vmem:[%s1 + $0x130] sm:$0xff]
        %v299 = vld [vmem:[%s1 + $0x138] sm:$0xff]
        %v300 = vld [vmem:[%s1 + $0x140] sm:$0xff]
        %v301 = vld [vmem:[%s1 + $0x148] sm:$0xff]
        %v302 = vld [vmem:[%s1 + $0x150] sm:$0xff]
        %v303 = vld [vmem:[%s1 + $0x158] sm:$0xff]
        %v304 = vld [vmem:[%s1 + $0x160] sm:$0xff]
        %v305 = vld [vmem:[%s1 + $0x168] sm:$0xff]
        %v306 = vld [vmem:[%s1 + $0x170] sm:$0xff]
        %v307 = vld [vmem:[%s1 + $0x178] sm:$0xff]
        %v308 = vld [vmem:[%s1 + $0x180] sm:$0xff]
        %v309 = vld [vmem:[%s1 + $0x188] sm:$0xff]
        %v310 = vld [vmem:[%s1 + $0x190] sm:$0xff]
        %v311 = vld [vmem:[%s1 + $0x198] sm:$0xff]
        %v312 = vld [vmem:[%s1 + $0x1a0] sm:$0xff]
        %v313 = vld [vmem:[%s1 + $0x1a8] sm:$0xff]
        %v314 = vld [vmem:[%s1 + $0x1b0] sm:$0xff]
        %v315 = vld [vmem:[%s1 + $0x1b8] sm:$0xff]
        %v316 = vld [vmem:[%s1 + $0x1c0] sm:$0xff]
        %v317 = vld [vmem:[%s1 + $0x1c8] sm:$0xff]
        %v318 = vld [vmem:[%s1 + $0x1d0] sm:$0xff]
        %v319 = vld [vmem:[%s1 + $0x1d8] sm:$0xff]
        %v320 = vld [vmem:[%s1 + $0x1e0] sm:$0xff]
        %v321 = vld [vmem:[%s1 + $0x1e8] sm:$0xff]
        %v322 = vld [vmem:[%s1 + $0x1f0] sm:$0xff]
        %v323 = vld [vmem:[%s1 + $0x1f8] sm:$0xff]
        %v324 = vld [vmem:[%s1 + $0x200] sm:$0xff]
        %v325 = vld [vmem:[%s1 + $0x208] sm:$0xff]
        %v326 = vld [vmem:[%s1 + $0x210] sm:$0xff]
        %v327 = vld [vmem:[%s1 + $0x218] sm:$0xff]
        %v328 = vld [vmem:[%s1 + $0x220] sm:$0xff]
        %v329 = vld [vmem:[%s1 + $0x228] sm:$0xff]
        %v330 = vld [vmem:[%s1 + $0x230] sm:$0xff]
        %v331 = vld [vmem:[%s1 + $0x238] sm:$0xff]
        %v332 = vld [vmem:[%s1 + $0x240] sm:$0xff]
        %v333 = vld [vmem:[%s1 + $0x248] sm:$0xff]
        %v334 = vld [vmem:[%s1 + $0x250] sm:$0xff]
        %v335 = vld [vmem:[%s1 + $0x258] sm:$0xff]
        %v336 = vld [vmem:[%s1 + $0x260] sm:$0xff]
        %v337 = vld [vmem:[%s1 + $0x268] sm:$0xff]
        %v338 = vld [vmem:[%s1 + $0x270] sm:$0xff]
        %v339 = vld [vmem:[%s1 + $0x278] sm:$0xff]
        %v340 = vld [vmem:[%s1 + $0x280] sm:$0xff]
        %v341 = vld [vmem:[%s1 + $0x288] sm:$0xff]
        %v342 = vld [vmem:[%s1 + $0x290] sm:$0xff]
        %v343 = vld [vmem:[%s1 + $0x298] sm:$0xff]
        %v344 = vld [vmem:[%s1 + $0x2a0] sm:$0xff]
        %v345 = vld [vmem:[%s1 + $0x2a8] sm:$0xff]
        %v346 = vld [vmem:[%s1 + $0x2b0] sm:$0xff]
        %v347 = vld [vmem:[%s1 + $0x2b8] sm:$0xff]
        %v348 = vld [vmem:[%s1 + $0x2c0] sm:$0xff]
        %v349 = vld [vmem:[%s1 + $0x2c8] sm:$0xff]
        %v350 = vld [vmem:[%s1 + $0x2d0] sm:$0xff]
        %v351 = vld [vmem:[%s1 + $0x2d8] sm:$0xff]
        %v352 = vld [vmem:[%s1 + $0x2e0] sm:$0xff]
        %v353 = vld [vmem:[%s1 + $0x2e8] sm:$0xff]
        %v354 = vld [vmem:[%s1 + $0x2f0] sm:$0xff]
        %v355 = vld [vmem:[%s1 + $0x2f8] sm:$0xff]
        %356 = vmatprep.subr.mxu0 %v261
        %357 = vmatpush1.msra.mxu0 %v260
        %358 = vmatprep.subr.mxu0 %v263
        %359 = vmatpush1.msra.mxu0 %v262
        %360 = vmatprep.subr.mxu0 %v265
        %361 = vmatpush1.msra.mxu0 %v264
        %362 = vmatprep.subr.mxu0 %v267
        %363 = vmatpush1.msra.mxu0 %v266
        %364 = vmatprep.subr.mxu0 %v269
        %365 = vmatpush1.msra.mxu0 %v268
        %366 = vmatprep.subr.mxu0 %v271
        %367 = vmatpush1.msra.mxu0 %v270
        %368 = vmatprep.subr.mxu0 %v273
        %369 = vmatpush1.msra.mxu0 %v272
        %370 = vmatprep.subr.mxu0 %v275
        %371 = vmatpush1.msra.mxu0 %v274
        %372 = vmatprep.subr.mxu0 %v277
        %373 = vmatpush1.msra.mxu0 %v276
        %374 = vmatprep.subr.mxu0 %v279
        %375 = vmatpush1.msra.mxu0 %v278
        %376 = vmatprep.subr.mxu0 %v281
        %377 = vmatpush1.msra.mxu0 %v280
        %378 = vmatprep.subr.mxu0 %v283
        %379 = vmatpush1.msra.mxu0 %v282
        %380 = vmatprep.subr.mxu0 %v285
        %381 = vmatpush1.msra.mxu0 %v284
        %382 = vmatprep.subr.mxu0 %v287
        %383 = vmatpush1.msra.mxu0 %v286
        %384 = vmatprep.subr.mxu0 %v289
        %385 = vmatpush1.msra.mxu0 %v288
        %386 = vmatprep.subr.mxu0 %v291
        %387 = vmatpush1.msra.mxu0 %v290
        %388 = vmatprep.subr.mxu0 %v293
        %389 = vmatpush1.msra.mxu0 %v292
        %390 = vmatprep.subr.mxu0 %v295
        %391 = vmatpush1.msra.mxu0 %v294
        %392 = vmatprep.subr.mxu0 %v297
        %393 = vmatpush1.msra.mxu0 %v296
        %394 = vmatprep.subr.mxu0 %v299
        %395 = vmatpush1.msra.mxu0 %v298
        %396 = vmatprep.subr.mxu0 %v301
        %397 = vmatpush1.msra.mxu0 %v300
        %398 = vmatprep.subr.mxu0 %v303
        %399 = vmatpush1.msra.mxu0 %v302
        %400 = vmatprep.subr.mxu0 %v305
        %401 = vmatpush1.msra.mxu0 %v304
        %402 = vmatprep.subr.mxu0 %v307
        %403 = vmatpush1.msra.mxu0 %v306
        %404 = vmatprep.subr.mxu0 %v309
        %405 = vmatpush1.msra.mxu0 %v308
        %406 = vmatprep.subr.mxu0 %v311
        %407 = vmatpush1.msra.mxu0 %v310
        %408 = vmatprep.subr.mxu0 %v313
        %409 = vmatpush1.msra.mxu0 %v312
        %410 = vmatprep.subr.mxu0 %v315
        %411 = vmatpush1.msra.mxu0 %v314
        %412 = vmatprep.subr.mxu0 %v317
        %413 = vmatpush1.msra.mxu0 %v316
        %414 = vmatprep.subr.mxu0 %v319
        %415 = vmatpush1.msra.mxu0 %v318
        %416 = vmatprep.subr.mxu0 %v321
        %417 = vmatpush1.msra.mxu0 %v320
        %418 = vmatprep.subr.mxu0 %v323
        %419 = vmatpush1.msra.mxu0 %v322
        %420 = vmatprep.mubr.f32.mxu0 %v165
        %421 = vmatmul.mubr.f32.gmra.mrb[0].mxu0 %v164
        %v422 = vpop.f32.mrb[0].mxu0
        %v423 = vadd.f32 0.0, %v422
        %v424 = vpop.f32.mrb[0].mxu0
        %v425 = vadd.f32 0.0, %v424
        %426 = vmatprep.mubr.f32.mxu0 %v168
        %427 = vmatmul.mubr.f32.gmra.mrb[0].mxu0 %v167
        %v428 = vpop.f32.mrb[0].mxu0
        %v429 = vadd.f32 0.0, %v428
        %v430 = vpop.f32.mrb[0].mxu0
        %v431 = vadd.f32 0.0, %v430
        %432 = vmatprep.mubr.f32.mxu0 %v171
        %433 = vmatmul.mubr.f32.gmra.mrb[0].mxu0 %v170
        %v434 = vpop.f32.mrb[0].mxu0
        %v435 = vadd.f32 0.0, %v434
        %v436 = vpop.f32.mrb[0].mxu0
        %v437 = vadd.f32 0.0, %v436
        %438 = vmatprep.mubr.f32.mxu0 %v174
        %439 = vmatmul.mubr.f32.gmra.mrb[0].mxu0 %v173
        %v440 = vpop.f32.mrb[0].mxu0
        %v441 = vadd.f32 0.0, %v440
        %v442 = vpop.f32.mrb[0].mxu0
        %v443 = vadd.f32 0.0, %v442
        %444 = vmatprep.mubr.f32.mxu0 %v177
        %445 = vmatmul.mubr.f32.gmra.mrb[0].mxu0 %v176
        %v446 = vpop.f32.mrb[0].mxu0
        %v447 = vadd.f32 0.0, %v446
        %v448 = vpop.f32.mrb[0].mxu0
        %v449 = vadd.f32 0.0, %v448
        %450 = vmatprep.mubr.f32.mxu0 %v180
        %451 = vmatmul.mubr.f32.gmra.mrb[0].mxu0 %v179
        %v452 = vpop.f32.mrb[0].mxu0
        %v453 = vadd.f32 0.0, %v452
        %v454 = vpop.f32.mrb[0].mxu0
        %v455 = vadd.f32 0.0, %v454
        %456 = vmatprep.mubr.f32.mxu0 %v183
        %457 = vmatmul.mubr.f32.gmra.mrb[0].mxu0 %v182
        %v458 = vpop.f32.mrb[0].mxu0
        %v459 = vadd.f32 0.0, %v458
        %v460 = vpop.f32.mrb[0].mxu0
        %v461 = vadd.f32 0.0, %v460
        %462 = vmatprep.mubr.f32.mxu0 %v186
        %463 = vmatmul.mubr.f32.gmra.mrb[0].mxu0 %v185
        %v464 = vpop.f32.mrb[0].mxu0
        %v465 = vadd.f32 0.0, %v464
        %v466 = vpop.f32.mrb[0].mxu0
        %v467 = vadd.f32 0.0, %v466
        %468 = vmatprep.mubr.f32.mxu0 %v189
        %469 = vmatmul.mubr.f32.gmra.mrb[0].mxu0 %v188
        %v470 = vpop.f32.mrb[0].mxu0
        %v471 = vadd.f32 0.0, %v470
        %v472 = vpop.f32.mrb[0].mxu0
        %v473 = vadd.f32 0.0, %v472
        %474 = vmatprep.mubr.f32.mxu0 %v192
        %475 = vmatmul.mubr.f32.gmra.mrb[0].mxu0 %v191
        %v476 = vpop.f32.mrb[0].mxu0
        %v477 = vadd.f32 0.0, %v476
        %v478 = vpop.f32.mrb[0].mxu0
        %v479 = vadd.f32 0.0, %v478
        %480 = vmatprep.mubr.f32.mxu0 %v195
        %481 = vmatmul.mubr.f32.gmra.mrb[0].mxu0 %v194
        %v482 = vpop.f32.mrb[0].mxu0
        %v483 = vadd.f32 0.0, %v482
        %v484 = vpop.f32.mrb[0].mxu0
        %v485 = vadd.f32 0.0, %v484
        %486 = vmatprep.mubr.f32.mxu0 %v198
        %487 = vmatmul.mubr.f32.gmra.mrb[0].mxu0 %v197
        %v488 = vpop.f32.mrb[0].mxu0
        %v489 = vadd.f32 0.0, %v488
        %v490 = vpop.f32.mrb[0].mxu0
        %v491 = vadd.f32 0.0, %v490
        %492 = vmatprep.mubr.f32.mxu0 %v201
        %493 = vmatmul.mubr.f32.gmra.mrb[0].mxu0 %v200
        %v494 = vpop.f32.mrb[0].mxu0
        %v495 = vadd.f32 0.0, %v494
        %v496 = vpop.f32.mrb[0].mxu0
        %v497 = vadd.f32 0.0, %v496
        %498 = vmatprep.mubr.f32.mxu0 %v204
        %499 = vmatmul.mubr.f32.gmra.mrb[0].mxu0 %v203
        %v500 = vpop.f32.mrb[0].mxu0
        %v501 = vadd.f32 0.0, %v500
        %v502 = vpop.f32.mrb[0].mxu0
        %v503 = vadd.f32 0.0, %v502
        %504 = vmatprep.mubr.f32.mxu0 %v207
        %505 = vmatmul.mubr.f32.gmra.mrb[0].mxu0 %v206
        %v506 = vpop.f32.mrb[0].mxu0
        %v507 = vadd.f32 0.0, %v506
        %v508 = vpop.f32.mrb[0].mxu0
        %v509 = vadd.f32 0.0, %v508
        %510 = vmatprep.mubr.f32.mxu0 %v210
        %511 = vmatmul.mubr.f32.gmra.mrb[0].mxu0 %v209
        %v512 = vpop.f32.mrb[0].mxu0
        %v513 = vadd.f32 0.0, %v512
        %v514 = vpop.f32.mrb[0].mxu0
        %v515 = vadd.f32 0.0, %v514
        %516 = vmatprep.mubr.f32.mxu0 %v213
        %517 = vmatmul.mubr.f32.gmra.mrb[0].mxu0 %v212
        %v518 = vpop.f32.mrb[0].mxu0
        %v519 = vadd.f32 0.0, %v518
        %v520 = vpop.f32.mrb[0].mxu0
        %v521 = vadd.f32 0.0, %v520
        %522 = vmatprep.mubr.f32.mxu0 %v216
        %523 = vmatmul.mubr.f32.gmra.mrb[0].mxu0 %v215
        %v524 = vpop.f32.mrb[0].mxu0
        %v525 = vadd.f32 0.0, %v524
        %v526 = vpop.f32.mrb[0].mxu0
        %v527 = vadd.f32 0.0, %v526
        %528 = vmatprep.mubr.f32.mxu0 %v219
        %529 = vmatmul.mubr.f32.gmra.mrb[0].mxu0 %v218
        %v530 = vpop.f32.mrb[0].mxu0
        %v531 = vadd.f32 0.0, %v530
        %v532 = vpop.f32.mrb[0].mxu0
        %v533 = vadd.f32 0.0, %v532
        %534 = vmatprep.mubr.f32.mxu0 %v222
        %535 = vmatmul.mubr.f32.gmra.mrb[0].mxu0 %v221
        %v536 = vpop.f32.mrb[0].mxu0
        %v537 = vadd.f32 0.0, %v536
        %v538 = vpop.f32.mrb[0].mxu0
        %v539 = vadd.f32 0.0, %v538
        %540 = vmatprep.mubr.f32.mxu0 %v225
        %541 = vmatmul.mubr.f32.gmra.mrb[0].mxu0 %v224
        %v542 = vpop.f32.mrb[0].mxu0
        %v543 = vadd.f32 0.0, %v542
        %v544 = vpop.f32.mrb[0].mxu0
        %v545 = vadd.f32 0.0, %v544
        %546 = vmatprep.mubr.f32.mxu0 %v228
        %547 = vmatmul.mubr.f32.gmra.mrb[0].mxu0 %v227
        %v548 = vpop.f32.mrb[0].mxu0
        %v549 = vadd.f32 0.0, %v548
        %v550 = vpop.f32.mrb[0].mxu0
        %v551 = vadd.f32 0.0, %v550
        %552 = vmatprep.mubr.f32.mxu0 %v231
        %553 = vmatmul.mubr.f32.gmra.mrb[0].mxu0 %v230
        %v554 = vpop.f32.mrb[0].mxu0
        %v555 = vadd.f32 0.0, %v554
        %v556 = vpop.f32.mrb[0].mxu0
        %v557 = vadd.f32 0.0, %v556
        %558 = vmatprep.mubr.f32.mxu0 %v234
        %559 = vmatmul.mubr.f32.gmra.mrb[0].mxu0 %v233
        %v560 = vpop.f32.mrb[0].mxu0
        %v561 = vadd.f32 0.0, %v560
        %v562 = vpop.f32.mrb[0].mxu0
        %v563 = vadd.f32 0.0, %v562
        %564 = vmatprep.mubr.f32.mxu0 %v237
        %565 = vmatmul.mubr.f32.gmra.mrb[0].mxu0 %v236
        %v566 = vpop.f32.mrb[0].mxu0
        %v567 = vadd.f32 0.0, %v566
        %v568 = vpop.f32.mrb[0].mxu0
        %v569 = vadd.f32 0.0, %v568
        %570 = vmatprep.mubr.f32.mxu0 %v240
        %571 = vmatmul.mubr.f32.gmra.mrb[0].mxu0 %v239
        %v572 = vpop.f32.mrb[0].mxu0
        %v573 = vadd.f32 0.0, %v572
        %v574 = vpop.f32.mrb[0].mxu0
        %v575 = vadd.f32 0.0, %v574
        %576 = vmatprep.mubr.f32.mxu0 %v243
        %577 = vmatmul.mubr.f32.gmra.mrb[0].mxu0 %v242
        %v578 = vpop.f32.mrb[0].mxu0
        %v579 = vadd.f32 0.0, %v578
        %v580 = vpop.f32.mrb[0].mxu0
        %v581 = vadd.f32 0.0, %v580
        %582 = vmatprep.mubr.f32.mxu0 %v246
        %583 = vmatmul.mubr.f32.gmra.mrb[0].mxu0 %v245
        %v584 = vpop.f32.mrb[0].mxu0
        %v585 = vadd.f32 0.0, %v584
        %v586 = vpop.f32.mrb[0].mxu0
        %v587 = vadd.f32 0.0, %v586
        %588 = vmatprep.mubr.f32.mxu0 %v249
        %589 = vmatmul.mubr.f32.gmra.mrb[0].mxu0 %v248
        %v590 = vpop.f32.mrb[0].mxu0
        %v591 = vadd.f32 0.0, %v590
        %v592 = vpop.f32.mrb[0].mxu0
        %v593 = vadd.f32 0.0, %v592
        %594 = vmatprep.mubr.f32.mxu0 %v252
        %595 = vmatmul.mubr.f32.gmra.mrb[0].mxu0 %v251
        %v596 = vpop.f32.mrb[0].mxu0
        %v597 = vadd.f32 0.0, %v596
        %v598 = vpop.f32.mrb[0].mxu0
        %v599 = vadd.f32 0.0, %v598
        %600 = vmatprep.mubr.f32.mxu0 %v255
        %601 = vmatmul.mubr.f32.gmra.mrb[0].mxu0 %v254
        %v602 = vpop.f32.mrb[0].mxu0
        %v603 = vadd.f32 0.0, %v602
        %v604 = vpop.f32.mrb[0].mxu0
        %v605 = vadd.f32 0.0, %v604
        %606 = vmatprep.mubr.f32.mxu0 %v258
        %607 = vmatmul.mubr.f32.gmra.mrb[0].mxu0 %v257
        %v608 = vpop.f32.mrb[0].mxu0
        %v609 = vadd.f32 0.0, %v608
        %v610 = vpop.f32.mrb[0].mxu0
        %v611 = vadd.f32 0.0, %v610
        %612 = vdwg.mxu0
        %613 = vmatprep.subr.mxu0 %v325
        %614 = vmatpush1.msra.mxu0 %v324
        %615 = vmatprep.subr.mxu0 %v327
        %616 = vmatpush1.msra.mxu0 %v326
        %617 = vmatprep.subr.mxu0 %v329
        %618 = vmatpush1.msra.mxu0 %v328
        %619 = vmatprep.subr.mxu0 %v331
        %620 = vmatpush1.msra.mxu0 %v330
        %621 = vmatprep.subr.mxu0 %v333
        %622 = vmatpush1.msra.mxu0 %v332
        %623 = vmatprep.subr.mxu0 %v335
        %624 = vmatpush1.msra.mxu0 %v334
        %625 = vmatprep.subr.mxu0 %v337
        %626 = vmatpush1.msra.mxu0 %v336
        %627 = vmatprep.subr.mxu0 %v339
        %628 = vmatpush1.msra.mxu0 %v338
        %629 = vmatprep.subr.mxu0 %v341
        %630 = vmatpush1.msra.mxu0 %v340
        %631 = vmatprep.subr.mxu0 %v343
        %632 = vmatpush1.msra.mxu0 %v342
        %633 = vmatprep.subr.mxu0 %v345
        %634 = vmatpush1.msra.mxu0 %v344
        %635 = vmatprep.subr.mxu0 %v347
        %636 = vmatpush1.msra.mxu0 %v346
        %637 = vmatprep.subr.mxu0 %v349
        %638 = vmatpush1.msra.mxu0 %v348
        %639 = vmatprep.subr.mxu0 %v351
        %640 = vmatpush1.msra.mxu0 %v350
        %641 = vmatprep.subr.mxu0 %v353
        %642 = vmatpush1.msra.mxu0 %v352
        %643 = vmatprep.subr.mxu0 %v355
        %644 = vmatpush1.msra.mxu0 %v354
        %645 = vmatprep.subr.mxu0 0.0
        %646 = vmatpush1.msra.mxu0 0.0
        %647 = vmatprep.subr.mxu0 0.0
        %648 = vmatpush1.msra.mxu0 0.0
        %649 = vmatprep.subr.mxu0 0.0
        %650 = vmatpush1.msra.mxu0 0.0
        %651 = vmatprep.subr.mxu0 0.0
        %652 = vmatpush1.msra.mxu0 0.0
        %653 = vmatprep.subr.mxu0 0.0
        %654 = vmatpush1.msra.mxu0 0.0
        %655 = vmatprep.subr.mxu0 0.0
        %656 = vmatpush1.msra.mxu0 0.0
        %657 = vmatprep.subr.mxu0 0.0
        %658 = vmatpush1.msra.mxu0 0.0
        %659 = vmatprep.subr.mxu0 0.0
        %660 = vmatpush1.msra.mxu0 0.0
        %661 = vmatprep.subr.mxu0 0.0
        %662 = vmatpush1.msra.mxu0 0.0
        %663 = vmatprep.subr.mxu0 0.0
        %664 = vmatpush1.msra.mxu0 0.0
        %665 = vmatprep.subr.mxu0 0.0
        %666 = vmatpush1.msra.mxu0 0.0
        %667 = vmatprep.subr.mxu0 0.0
        %668 = vmatpush1.msra.mxu0 0.0
        %669 = vmatprep.subr.mxu0 0.0
        %670 = vmatpush1.msra.mxu0 0.0
        %671 = vmatprep.subr.mxu0 0.0
        %672 = vmatpush1.msra.mxu0 0.0
        %673 = vmatprep.subr.mxu0 0.0
        %674 = vmatpush1.msra.mxu0 0.0
        %675 = vmatprep.subr.mxu0 0.0
        %676 = vmatpush1.msra.mxu0 0.0
        %677 = vmatprep.mubr.f32.mxu0 0.0
        %678 = vmatmul.mubr.f32.gmra.mrb[0].mxu0 %v166
        %v679 = vpop.f32.mrb[0].mxu0
        %v680 = vadd.f32 %v423, %v679
        %v681 = vpop.f32.mrb[0].mxu0
        %v682 = vadd.f32 %v425, %v681
        %683 = vmatprep.mubr.f32.mxu0 0.0
        %684 = vmatmul.mubr.f32.gmra.mrb[0].mxu0 %v169
        %v685 = vpop.f32.mrb[0].mxu0
        %v686 = vadd.f32 %v429, %v685
        %v687 = vpop.f32.mrb[0].mxu0
        %v688 = vadd.f32 %v431, %v687
        %689 = vmatprep.mubr.f32.mxu0 0.0
        %690 = vmatmul.mubr.f32.gmra.mrb[0].mxu0 %v172
        %v691 = vpop.f32.mrb[0].mxu0
        %v692 = vadd.f32 %v435, %v691
        %v693 = vpop.f32.mrb[0].mxu0
        %v694 = vadd.f32 %v437, %v693
        %695 = vmatprep.mubr.f32.mxu0 0.0
        %696 = vmatmul.mubr.f32.gmra.mrb[0].mxu0 %v175
        %v697 = vpop.f32.mrb[0].mxu0
        %v698 = vadd.f32 %v441, %v697
        %v699 = vpop.f32.mrb[0].mxu0
        %v700 = vadd.f32 %v443, %v699
        %701 = vmatprep.mubr.f32.mxu0 0.0
        %702 = vmatmul.mubr.f32.gmra.mrb[0].mxu0 %v178
        %v703 = vpop.f32.mrb[0].mxu0
        %v704 = vadd.f32 %v447, %v703
        %v705 = vpop.f32.mrb[0].mxu0
        %v706 = vadd.f32 %v449, %v705
        %707 = vmatprep.mubr.f32.mxu0 0.0
        %708 = vmatmul.mubr.f32.gmra.mrb[0].mxu0 %v181
        %v709 = vpop.f32.mrb[0].mxu0
        %v710 = vadd.f32 %v453, %v709
        %v711 = vpop.f32.mrb[0].mxu0
        %v712 = vadd.f32 %v455, %v711
        %713 = vmatprep.mubr.f32.mxu0 0.0
        %714 = vmatmul.mubr.f32.gmra.mrb[0].mxu0 %v184
        %v715 = vpop.f32.mrb[0].mxu0
        %v716 = vadd.f32 %v459, %v715
        %v717 = vpop.f32.mrb[0].mxu0
        %v718 = vadd.f32 %v461, %v717
        %719 = vmatprep.mubr.f32.mxu0 0.0
        %720 = vmatmul.mubr.f32.gmra.mrb[0].mxu0 %v187
        %v721 = vpop.f32.mrb[0].mxu0
        %v722 = vadd.f32 %v465, %v721
        %v723 = vpop.f32.mrb[0].mxu0
        %v724 = vadd.f32 %v467, %v723
        %725 = vmatprep.mubr.f32.mxu0 0.0
        %726 = vmatmul.mubr.f32.gmra.mrb[0].mxu0 %v190
        %v727 = vpop.f32.mrb[0].mxu0
        %v728 = vadd.f32 %v471, %v727
        %v729 = vpop.f32.mrb[0].mxu0
        %v730 = vadd.f32 %v473, %v729
        %731 = vmatprep.mubr.f32.mxu0 0.0
        %732 = vmatmul.mubr.f32.gmra.mrb[0].mxu0 %v193
        %v733 = vpop.f32.mrb[0].mxu0
        %v734 = vadd.f32 %v477, %v733
        %v735 = vpop.f32.mrb[0].mxu0
        %v736 = vadd.f32 %v479, %v735
        %737 = vmatprep.mubr.f32.mxu0 0.0
        %738 = vmatmul.mubr.f32.gmra.mrb[0].mxu0 %v196
        %v739 = vpop.f32.mrb[0].mxu0
        %v740 = vadd.f32 %v483, %v739
        %v741 = vpop.f32.mrb[0].mxu0
        %v742 = vadd.f32 %v485, %v741
        %743 = vmatprep.mubr.f32.mxu0 0.0
        %744 = vmatmul.mubr.f32.gmra.mrb[0].mxu0 %v199
        %v745 = vpop.f32.mrb[0].mxu0
        %v746 = vadd.f32 %v489, %v745
        %v747 = vpop.f32.mrb[0].mxu0
        %v748 = vadd.f32 %v491, %v747
        %749 = vmatprep.mubr.f32.mxu0 0.0
        %750 = vmatmul.mubr.f32.gmra.mrb[0].mxu0 %v202
        %v751 = vpop.f32.mrb[0].mxu0
        %v752 = vadd.f32 %v495, %v751
        %v753 = vpop.f32.mrb[0].mxu0
        %v754 = vadd.f32 %v497, %v753
        %755 = vmatprep.mubr.f32.mxu0 0.0
        %756 = vmatmul.mubr.f32.gmra.mrb[0].mxu0 %v205
        %v757 = vpop.f32.mrb[0].mxu0
        %v758 = vadd.f32 %v501, %v757
        %v759 = vpop.f32.mrb[0].mxu0
        %v760 = vadd.f32 %v503, %v759
        %761 = vmatprep.mubr.f32.mxu0 0.0
        %762 = vmatmul.mubr.f32.gmra.mrb[0].mxu0 %v208
        %v763 = vpop.f32.mrb[0].mxu0
        %v764 = vadd.f32 %v507, %v763
        %v765 = vpop.f32.mrb[0].mxu0
        %v766 = vadd.f32 %v509, %v765
        %767 = vmatprep.mubr.f32.mxu0 0.0
        %768 = vmatmul.mubr.f32.gmra.mrb[0].mxu0 %v211
        %v769 = vpop.f32.mrb[0].mxu0
        %v770 = vadd.f32 %v513, %v769
        %v771 = vpop.f32.mrb[0].mxu0
        %v772 = vadd.f32 %v515, %v771
        %773 = vmatprep.mubr.f32.mxu0 0.0
        %774 = vmatmul.mubr.f32.gmra.mrb[0].mxu0 %v214
        %v775 = vpop.f32.mrb[0].mxu0
        %v776 = vadd.f32 %v519, %v775
        %v777 = vpop.f32.mrb[0].mxu0
        %v778 = vadd.f32 %v521, %v777
        %779 = vmatprep.mubr.f32.mxu0 0.0
        %780 = vmatmul.mubr.f32.gmra.mrb[0].mxu0 %v217
        %v781 = vpop.f32.mrb[0].mxu0
        %v782 = vadd.f32 %v525, %v781
        %v783 = vpop.f32.mrb[0].mxu0
        %v784 = vadd.f32 %v527, %v783
        %785 = vmatprep.mubr.f32.mxu0 0.0
        %786 = vmatmul.mubr.f32.gmra.mrb[0].mxu0 %v220
        %v787 = vpop.f32.mrb[0].mxu0
        %v788 = vadd.f32 %v531, %v787
        %v789 = vpop.f32.mrb[0].mxu0
        %v790 = vadd.f32 %v533, %v789
        %791 = vmatprep.mubr.f32.mxu0 0.0
        %792 = vmatmul.mubr.f32.gmra.mrb[0].mxu0 %v223
        %v793 = vpop.f32.mrb[0].mxu0
        %v794 = vadd.f32 %v537, %v793
        %v795 = vpop.f32.mrb[0].mxu0
        %v796 = vadd.f32 %v539, %v795
        %797 = vmatprep.mubr.f32.mxu0 0.0
        %798 = vmatmul.mubr.f32.gmra.mrb[0].mxu0 %v226
        %v799 = vpop.f32.mrb[0].mxu0
        %v800 = vadd.f32 %v543, %v799
        %v801 = vpop.f32.mrb[0].mxu0
        %v802 = vadd.f32 %v545, %v801
        %803 = vmatprep.mubr.f32.mxu0 0.0
        %804 = vmatmul.mubr.f32.gmra.mrb[0].mxu0 %v229
        %v805 = vpop.f32.mrb[0].mxu0
        %v806 = vadd.f32 %v549, %v805
        %v807 = vpop.f32.mrb[0].mxu0
        %v808 = vadd.f32 %v551, %v807
        %809 = vmatprep.mubr.f32.mxu0 0.0
        %810 = vmatmul.mubr.f32.gmra.mrb[0].mxu0 %v232
        %v811 = vpop.f32.mrb[0].mxu0
        %v812 = vadd.f32 %v555, %v811
        %v813 = vpop.f32.mrb[0].mxu0
        %v814 = vadd.f32 %v557, %v813
        %815 = vmatprep.mubr.f32.mxu0 0.0
        %816 = vmatmul.mubr.f32.gmra.mrb[0].mxu0 %v235
        %v817 = vpop.f32.mrb[0].mxu0
        %v818 = vadd.f32 %v561, %v817
        %v819 = vpop.f32.mrb[0].mxu0
        %v820 = vadd.f32 %v563, %v819
        %821 = vmatprep.mubr.f32.mxu0 0.0
        %822 = vmatmul.mubr.f32.gmra.mrb[0].mxu0 %v238
        %v823 = vpop.f32.mrb[0].mxu0
        %v824 = vadd.f32 %v567, %v823
        %v825 = vpop.f32.mrb[0].mxu0
        %v826 = vadd.f32 %v569, %v825
        %827 = vmatprep.mubr.f32.mxu0 0.0
        %828 = vmatmul.mubr.f32.gmra.mrb[0].mxu0 %v241
        %v829 = vpop.f32.mrb[0].mxu0
        %v830 = vadd.f32 %v573, %v829
        %v831 = vpop.f32.mrb[0].mxu0
        %v832 = vadd.f32 %v575, %v831
        %833 = vmatprep.mubr.f32.mxu0 0.0
        %834 = vmatmul.mubr.f32.gmra.mrb[0].mxu0 %v244
        %v835 = vpop.f32.mrb[0].mxu0
        %v836 = vadd.f32 %v579, %v835
        %v837 = vpop.f32.mrb[0].mxu0
        %v838 = vadd.f32 %v581, %v837
        %839 = vmatprep.mubr.f32.mxu0 0.0
        %840 = vmatmul.mubr.f32.gmra.mrb[0].mxu0 %v247
        %v841 = vpop.f32.mrb[0].mxu0
        %v842 = vadd.f32 %v585, %v841
        %v843 = vpop.f32.mrb[0].mxu0
        %v844 = vadd.f32 %v587, %v843
        %845 = vmatprep.mubr.f32.mxu0 0.0
        %846 = vmatmul.mubr.f32.gmra.mrb[0].mxu0 %v250
        %v847 = vpop.f32.mrb[0].mxu0
        %v848 = vadd.f32 %v591, %v847
        %v849 = vpop.f32.mrb[0].mxu0
        %v850 = vadd.f32 %v593, %v849
        %851 = vmatprep.mubr.f32.mxu0 0.0
        %852 = vmatmul.mubr.f32.gmra.mrb[0].mxu0 %v253
        %v853 = vpop.f32.mrb[0].mxu0
        %v854 = vadd.f32 %v597, %v853
        %v855 = vpop.f32.mrb[0].mxu0
        %v856 = vadd.f32 %v599, %v855
        %857 = vmatprep.mubr.f32.mxu0 0.0
        %858 = vmatmul.mubr.f32.gmra.mrb[0].mxu0 %v256
        %v859 = vpop.f32.mrb[0].mxu0
        %v860 = vadd.f32 %v603, %v859
        %v861 = vpop.f32.mrb[0].mxu0
        %v862 = vadd.f32 %v605, %v861
        %863 = vmatprep.mubr.f32.mxu0 0.0
        %864 = vmatmul.mubr.f32.gmra.mrb[0].mxu0 %v259
        %v865 = vpop.f32.mrb[0].mxu0
        %v866 = vadd.f32 %v609, %v865
        %v867 = vpop.f32.mrb[0].mxu0
        %v868 = vadd.f32 %v611, %v867
        %869 = vdwg.mxu0
        %902 = vrot.lane.b32.xlu0 %v680, 64
        %v903 = vpop.permute.xlu0 %902
        %904 = vrot.lane.b32.xlu0 %v686, 64
        %v905 = vpop.permute.xlu0 %904
        %906 = vrot.lane.b32.xlu0 %v692, 64
        %v907 = vpop.permute.xlu0 %906
        %908 = vrot.lane.b32.xlu0 %v698, 64
        %v909 = vpop.permute.xlu0 %908
        %910 = vrot.lane.b32.xlu0 %v704, 64
        %v911 = vpop.permute.xlu0 %910
        %912 = vrot.lane.b32.xlu0 %v710, 64
        %v913 = vpop.permute.xlu0 %912
        %914 = vrot.lane.b32.xlu0 %v716, 64
        %v915 = vpop.permute.xlu0 %914
        %916 = vrot.lane.b32.xlu0 %v722, 64
        %v917 = vpop.permute.xlu0 %916
        %918 = vrot.lane.b32.xlu0 %v728, 64
        %v919 = vpop.permute.xlu0 %918
        %920 = vrot.lane.b32.xlu0 %v734, 64
        %v921 = vpop.permute.xlu0 %920
        %922 = vrot.lane.b32.xlu0 %v740, 64
        %v923 = vpop.permute.xlu0 %922
        %924 = vrot.lane.b32.xlu0 %v746, 64
        %v925 = vpop.permute.xlu0 %924
        %926 = vrot.lane.b32.xlu0 %v752, 64
        %v927 = vpop.permute.xlu0 %926
        %928 = vrot.lane.b32.xlu0 %v758, 64
        %v929 = vpop.permute.xlu0 %928
        %930 = vrot.lane.b32.xlu0 %v764, 64
        %v931 = vpop.permute.xlu0 %930
        %932 = vrot.lane.b32.xlu0 %v770, 64
        %v933 = vpop.permute.xlu0 %932
        %934 = vrot.lane.b32.xlu0 %v776, 64
        %v935 = vpop.permute.xlu0 %934
        %936 = vrot.lane.b32.xlu0 %v782, 64
        %v937 = vpop.permute.xlu0 %936
        %938 = vrot.lane.b32.xlu0 %v788, 64
        %v939 = vpop.permute.xlu0 %938
        %940 = vrot.lane.b32.xlu0 %v794, 64
        %v941 = vpop.permute.xlu0 %940
        %942 = vrot.lane.b32.xlu0 %v800, 64
        %v943 = vpop.permute.xlu0 %942
        %944 = vrot.lane.b32.xlu0 %v806, 64
        %v945 = vpop.permute.xlu0 %944
        %946 = vrot.lane.b32.xlu0 %v812, 64
        %v947 = vpop.permute.xlu0 %946
        %948 = vrot.lane.b32.xlu0 %v818, 64
        %v949 = vpop.permute.xlu0 %948
        %950 = vrot.lane.b32.xlu0 %v824, 64
        %v951 = vpop.permute.xlu0 %950
        %952 = vrot.lane.b32.xlu0 %v830, 64
        %v953 = vpop.permute.xlu0 %952
        %954 = vrot.lane.b32.xlu0 %v836, 64
        %v955 = vpop.permute.xlu0 %954
        %956 = vrot.lane.b32.xlu0 %v842, 64
        %v957 = vpop.permute.xlu0 %956
        %958 = vrot.lane.b32.xlu0 %v848, 64
        %v959 = vpop.permute.xlu0 %958
        %960 = vrot.lane.b32.xlu0 %v854, 64
        %v961 = vpop.permute.xlu0 %960
        %962 = vrot.lane.b32.xlu0 %v860, 64
        %v963 = vpop.permute.xlu0 %962
        %964 = vrot.lane.b32.xlu0 %v866, 64
        %v965 = vpop.permute.xlu0 %964
        %vm966 = vcmask 523264
        %v967 = vsel %vm966, %v680, 0
        %v969 = vsel %vm966, %v686, 0
        %v971 = vsel %vm966, %v692, 0
        %v973 = vsel %vm966, %v698, 0
        %v975 = vsel %vm966, %v704, 0
        %v977 = vsel %vm966, %v710, 0
        %v979 = vsel %vm966, %v716, 0
        %v981 = vsel %vm966, %v722, 0
        %v983 = vsel %vm966, %v728, 0
        %v985 = vsel %vm966, %v734, 0
        %v987 = vsel %vm966, %v740, 0
        %v989 = vsel %vm966, %v746, 0
        %v991 = vsel %vm966, %v752, 0
        %v993 = vsel %vm966, %v758, 0
        %v995 = vsel %vm966, %v764, 0
        %v997 = vsel %vm966, %v770, 0
        %v999 = vsel %vm966, %v776, 0
        %v1001 = vsel %vm966, %v782, 0
        %v1003 = vsel %vm966, %v788, 0
        %v1005 = vsel %vm966, %v794, 0
        %v1007 = vsel %vm966, %v800, 0
        %v1009 = vsel %vm966, %v806, 0
        %v1011 = vsel %vm966, %v812, 0
        %v1013 = vsel %vm966, %v818, 0
        %v1015 = vsel %vm966, %v824, 0
        %v1017 = vsel %vm966, %v830, 0
        %v1019 = vsel %vm966, %v836, 0
        %v1021 = vsel %vm966, %v842, 0
        %v1023 = vsel %vm966, %v848, 0
        %v1025 = vsel %vm966, %v854, 0
        %v1027 = vsel %vm966, %v860, 0
        %v1029 = vsel %vm966, %v866, 0
        %v1031 = vsel %vm966, %v903, 0
        %v1033 = vsel %vm966, %v905, 0
        %v1035 = vsel %vm966, %v907, 0
        %v1037 = vsel %vm966, %v909, 0
        %v1039 = vsel %vm966, %v911, 0
        %v1041 = vsel %vm966, %v913, 0
        %v1043 = vsel %vm966, %v915, 0
        %v1045 = vsel %vm966, %v917, 0
        %v1047 = vsel %vm966, %v919, 0
        %v1049 = vsel %vm966, %v921, 0
        %v1051 = vsel %vm966, %v923, 0
        %v1053 = vsel %vm966, %v925, 0
        %v1055 = vsel %vm966, %v927, 0
        %v1057 = vsel %vm966, %v929, 0
        %v1059 = vsel %vm966, %v931, 0
        %v1061 = vsel %vm966, %v933, 0
        %v1063 = vsel %vm966, %v935, 0
        %v1065 = vsel %vm966, %v937, 0
        %v1067 = vsel %vm966, %v939, 0
        %v1069 = vsel %vm966, %v941, 0
        %v1071 = vsel %vm966, %v943, 0
        %v1073 = vsel %vm966, %v945, 0
        %v1075 = vsel %vm966, %v947, 0
        %v1077 = vsel %vm966, %v949, 0
        %v1079 = vsel %vm966, %v951, 0
        %v1081 = vsel %vm966, %v953, 0
        %v1083 = vsel %vm966, %v955, 0
        %v1085 = vsel %vm966, %v957, 0
        %v1087 = vsel %vm966, %v959, 0
        %v1089 = vsel %vm966, %v961, 0
        %v1091 = vsel %vm966, %v963, 0
        %v1093 = vsel %vm966, %v965, 0
        %1095 = vmatprep.subr.mxu0 0.0
        %1096 = vmatpush1.xpose.msra.mxu0 %v1031
        %1097 = vmatprep.subr.mxu0 0.0
        %1098 = vmatpush1.xpose.msra.mxu0 %v1033
        %1099 = vmatprep.subr.mxu0 0.0
        %1100 = vmatpush1.xpose.msra.mxu0 %v1035
        %1101 = vmatprep.subr.mxu0 0.0
        %1102 = vmatpush1.xpose.msra.mxu0 %v1037
        %1103 = vmatprep.subr.mxu0 0.0
        %1104 = vmatpush1.xpose.msra.mxu0 %v1039
        %1105 = vmatprep.subr.mxu0 0.0
        %1106 = vmatpush1.xpose.msra.mxu0 %v1041
        %1107 = vmatprep.subr.mxu0 0.0
        %1108 = vmatpush1.xpose.msra.mxu0 %v1043
        %1109 = vmatprep.subr.mxu0 0.0
        %1110 = vmatpush1.xpose.msra.mxu0 %v1045
        %1111 = vmatprep.subr.mxu0 0.0
        %1112 = vmatpush1.xpose.msra.mxu0 %v1047
        %1113 = vmatprep.subr.mxu0 0.0
        %1114 = vmatpush1.xpose.msra.mxu0 %v1049
        %1115 = vmatprep.subr.mxu0 0.0
        %1116 = vmatpush1.xpose.msra.mxu0 %v1051
        %1117 = vmatprep.subr.mxu0 0.0
        %1118 = vmatpush1.xpose.msra.mxu0 %v1053
        %1119 = vmatprep.subr.mxu0 0.0
        %1120 = vmatpush1.xpose.msra.mxu0 %v1055
        %1121 = vmatprep.subr.mxu0 0.0
        %1122 = vmatpush1.xpose.msra.mxu0 %v1057
        %1123 = vmatprep.subr.mxu0 0.0
        %1124 = vmatpush1.xpose.msra.mxu0 %v1059
        %1125 = vmatprep.subr.mxu0 0.0
        %1126 = vmatpush1.xpose.msra.mxu0 %v1061
        %1127 = vmatprep.subr.mxu0 0.0
        %1128 = vmatpush1.xpose.msra.mxu0 %v1063
        %1129 = vmatprep.subr.mxu0 0.0
        %1130 = vmatpush1.xpose.msra.mxu0 %v1065
        %1131 = vmatprep.subr.mxu0 0.0
        %1132 = vmatpush1.xpose.msra.mxu0 %v1067
        %1133 = vmatprep.subr.mxu0 0.0
        %1134 = vmatpush1.xpose.msra.mxu0 %v1069
        %1135 = vmatprep.subr.mxu0 0.0
        %1136 = vmatpush1.xpose.msra.mxu0 %v1071
        %1137 = vmatprep.subr.mxu0 0.0
        %1138 = vmatpush1.xpose.msra.mxu0 %v1073
        %1139 = vmatprep.subr.mxu0 0.0
        %1140 = vmatpush1.xpose.msra.mxu0 %v1075
        %1141 = vmatprep.subr.mxu0 0.0
        %1142 = vmatpush1.xpose.msra.mxu0 %v1077
        %1143 = vmatprep.subr.mxu0 0.0
        %1144 = vmatpush1.xpose.msra.mxu0 %v1079
        %1145 = vmatprep.subr.mxu0 0.0
        %1146 = vmatpush1.xpose.msra.mxu0 %v1081
        %1147 = vmatprep.subr.mxu0 0.0
        %1148 = vmatpush1.xpose.msra.mxu0 %v1083
        %1149 = vmatprep.subr.mxu0 0.0
        %1150 = vmatpush1.xpose.msra.mxu0 %v1085
        %1151 = vmatprep.subr.mxu0 0.0
        %1152 = vmatpush1.xpose.msra.mxu0 %v1087
        %1153 = vmatprep.subr.mxu0 0.0
        %1154 = vmatpush1.xpose.msra.mxu0 %v1089
        %1155 = vmatprep.subr.mxu0 0.0
        %1156 = vmatpush1.xpose.msra.mxu0 %v1091
        %1157 = vmatprep.subr.mxu0 0.0
        %1158 = vmatpush1.xpose.msra.mxu0 %v1093
        %1159 = vmatprep.mubr.f32.mxu0 0.0
        %1160 = vmatmul.mubr.f32.gmra.mrb[0].mxu0 %v967
        %v1161 = vpop.f32.mrb[0].mxu0
        %v1162 = vadd.f32 0.0, %v1161
        %v1163 = vpop.f32.mrb[0].mxu0
        %v1164 = vadd.f32 0.0, %v1163
        %1165 = vmatprep.mubr.f32.mxu0 0.0
        %1166 = vmatmul.mubr.f32.gmra.mrb[0].mxu0 %v969
        %v1167 = vpop.f32.mrb[0].mxu0
        %v1168 = vadd.f32 0.0, %v1167
        %v1169 = vpop.f32.mrb[0].mxu0
        %v1170 = vadd.f32 0.0, %v1169
        %1171 = vmatprep.mubr.f32.mxu0 0.0
        %1172 = vmatmul.mubr.f32.gmra.mrb[0].mxu0 %v971
        %v1173 = vpop.f32.mrb[0].mxu0
        %v1174 = vadd.f32 0.0, %v1173
        %v1175 = vpop.f32.mrb[0].mxu0
        %v1176 = vadd.f32 0.0, %v1175
        %1177 = vmatprep.mubr.f32.mxu0 0.0
        %1178 = vmatmul.mubr.f32.gmra.mrb[0].mxu0 %v973
        %v1179 = vpop.f32.mrb[0].mxu0
        %v1180 = vadd.f32 0.0, %v1179
        %v1181 = vpop.f32.mrb[0].mxu0
        %v1182 = vadd.f32 0.0, %v1181
        %1183 = vmatprep.mubr.f32.mxu0 0.0
        %1184 = vmatmul.mubr.f32.gmra.mrb[0].mxu0 %v975
        %v1185 = vpop.f32.mrb[0].mxu0
        %v1186 = vadd.f32 0.0, %v1185
        %v1187 = vpop.f32.mrb[0].mxu0
        %v1188 = vadd.f32 0.0, %v1187
        %1189 = vmatprep.mubr.f32.mxu0 0.0
        %1190 = vmatmul.mubr.f32.gmra.mrb[0].mxu0 %v977
        %v1191 = vpop.f32.mrb[0].mxu0
        %v1192 = vadd.f32 0.0, %v1191
        %v1193 = vpop.f32.mrb[0].mxu0
        %v1194 = vadd.f32 0.0, %v1193
        %1195 = vmatprep.mubr.f32.mxu0 0.0
        %1196 = vmatmul.mubr.f32.gmra.mrb[0].mxu0 %v979
        %v1197 = vpop.f32.mrb[0].mxu0
        %v1198 = vadd.f32 0.0, %v1197
        %v1199 = vpop.f32.mrb[0].mxu0
        %v1200 = vadd.f32 0.0, %v1199
        %1201 = vmatprep.mubr.f32.mxu0 0.0
        %1202 = vmatmul.mubr.f32.gmra.mrb[0].mxu0 %v981
        %v1203 = vpop.f32.mrb[0].mxu0
        %v1204 = vadd.f32 0.0, %v1203
        %v1205 = vpop.f32.mrb[0].mxu0
        %v1206 = vadd.f32 0.0, %v1205
        %1207 = vmatprep.mubr.f32.mxu0 0.0
        %1208 = vmatmul.mubr.f32.gmra.mrb[0].mxu0 %v983
        %v1209 = vpop.f32.mrb[0].mxu0
        %v1210 = vadd.f32 0.0, %v1209
        %v1211 = vpop.f32.mrb[0].mxu0
        %v1212 = vadd.f32 0.0, %v1211
        %1213 = vmatprep.mubr.f32.mxu0 0.0
        %1214 = vmatmul.mubr.f32.gmra.mrb[0].mxu0 %v985
        %v1215 = vpop.f32.mrb[0].mxu0
        %v1216 = vadd.f32 0.0, %v1215
        %v1217 = vpop.f32.mrb[0].mxu0
        %v1218 = vadd.f32 0.0, %v1217
        %1219 = vmatprep.mubr.f32.mxu0 0.0
        %1220 = vmatmul.mubr.f32.gmra.mrb[0].mxu0 %v987
        %v1221 = vpop.f32.mrb[0].mxu0
        %v1222 = vadd.f32 0.0, %v1221
        %v1223 = vpop.f32.mrb[0].mxu0
        %v1224 = vadd.f32 0.0, %v1223
        %1225 = vmatprep.mubr.f32.mxu0 0.0
        %1226 = vmatmul.mubr.f32.gmra.mrb[0].mxu0 %v989
        %v1227 = vpop.f32.mrb[0].mxu0
        %v1228 = vadd.f32 0.0, %v1227
        %v1229 = vpop.f32.mrb[0].mxu0
        %v1230 = vadd.f32 0.0, %v1229
        %1231 = vmatprep.mubr.f32.mxu0 0.0
        %1232 = vmatmul.mubr.f32.gmra.mrb[0].mxu0 %v991
        %v1233 = vpop.f32.mrb[0].mxu0
        %v1234 = vadd.f32 0.0, %v1233
        %v1235 = vpop.f32.mrb[0].mxu0
        %v1236 = vadd.f32 0.0, %v1235
        %1237 = vmatprep.mubr.f32.mxu0 0.0
        %1238 = vmatmul.mubr.f32.gmra.mrb[0].mxu0 %v993
        %v1239 = vpop.f32.mrb[0].mxu0
        %v1240 = vadd.f32 0.0, %v1239
        %v1241 = vpop.f32.mrb[0].mxu0
        %v1242 = vadd.f32 0.0, %v1241
        %1243 = vmatprep.mubr.f32.mxu0 0.0
        %1244 = vmatmul.mubr.f32.gmra.mrb[0].mxu0 %v995
        %v1245 = vpop.f32.mrb[0].mxu0
        %v1246 = vadd.f32 0.0, %v1245
        %v1247 = vpop.f32.mrb[0].mxu0
        %v1248 = vadd.f32 0.0, %v1247
        %1249 = vmatprep.mubr.f32.mxu0 0.0
        %1250 = vmatmul.mubr.f32.gmra.mrb[0].mxu0 %v997
        %v1251 = vpop.f32.mrb[0].mxu0
        %v1252 = vadd.f32 0.0, %v1251
        %v1253 = vpop.f32.mrb[0].mxu0
        %v1254 = vadd.f32 0.0, %v1253
        %1255 = vmatprep.mubr.f32.mxu0 0.0
        %1256 = vmatmul.mubr.f32.gmra.mrb[0].mxu0 %v999
        %v1257 = vpop.f32.mrb[0].mxu0
        %v1258 = vadd.f32 0.0, %v1257
        %v1259 = vpop.f32.mrb[0].mxu0
        %v1260 = vadd.f32 0.0, %v1259
        %1261 = vmatprep.mubr.f32.mxu0 0.0
        %1262 = vmatmul.mubr.f32.gmra.mrb[0].mxu0 %v1001
        %v1263 = vpop.f32.mrb[0].mxu0
        %v1264 = vadd.f32 0.0, %v1263
        %v1265 = vpop.f32.mrb[0].mxu0
        %v1266 = vadd.f32 0.0, %v1265
        %1267 = vmatprep.mubr.f32.mxu0 0.0
        %1268 = vmatmul.mubr.f32.gmra.mrb[0].mxu0 %v1003
        %v1269 = vpop.f32.mrb[0].mxu0
        %v1270 = vadd.f32 0.0, %v1269
        %v1271 = vpop.f32.mrb[0].mxu0
        %v1272 = vadd.f32 0.0, %v1271
        %1273 = vmatprep.mubr.f32.mxu0 0.0
        %1274 = vmatmul.mubr.f32.gmra.mrb[0].mxu0 %v1005
        %v1275 = vpop.f32.mrb[0].mxu0
        %v1276 = vadd.f32 0.0, %v1275
        %v1277 = vpop.f32.mrb[0].mxu0
        %v1278 = vadd.f32 0.0, %v1277
        %1279 = vmatprep.mubr.f32.mxu0 0.0
        %1280 = vmatmul.mubr.f32.gmra.mrb[0].mxu0 %v1007
        %v1281 = vpop.f32.mrb[0].mxu0
        %v1282 = vadd.f32 0.0, %v1281
        %v1283 = vpop.f32.mrb[0].mxu0
        %v1284 = vadd.f32 0.0, %v1283
        %1285 = vmatprep.mubr.f32.mxu0 0.0
        %1286 = vmatmul.mubr.f32.gmra.mrb[0].mxu0 %v1009
        %v1287 = vpop.f32.mrb[0].mxu0
        %v1288 = vadd.f32 0.0, %v1287
        %v1289 = vpop.f32.mrb[0].mxu0
        %v1290 = vadd.f32 0.0, %v1289
        %1291 = vmatprep.mubr.f32.mxu0 0.0
        %1292 = vmatmul.mubr.f32.gmra.mrb[0].mxu0 %v1011
        %v1293 = vpop.f32.mrb[0].mxu0
        %v1294 = vadd.f32 0.0, %v1293
        %v1295 = vpop.f32.mrb[0].mxu0
        %v1296 = vadd.f32 0.0, %v1295
        %1297 = vmatprep.mubr.f32.mxu0 0.0
        %1298 = vmatmul.mubr.f32.gmra.mrb[0].mxu0 %v1013
        %v1299 = vpop.f32.mrb[0].mxu0
        %v1300 = vadd.f32 0.0, %v1299
        %v1301 = vpop.f32.mrb[0].mxu0
        %v1302 = vadd.f32 0.0, %v1301
        %1303 = vmatprep.mubr.f32.mxu0 0.0
        %1304 = vmatmul.mubr.f32.gmra.mrb[0].mxu0 %v1015
        %v1305 = vpop.f32.mrb[0].mxu0
        %v1306 = vadd.f32 0.0, %v1305
        %v1307 = vpop.f32.mrb[0].mxu0
        %v1308 = vadd.f32 0.0, %v1307
        %1309 = vmatprep.mubr.f32.mxu0 0.0
        %1310 = vmatmul.mubr.f32.gmra.mrb[0].mxu0 %v1017
        %v1311 = vpop.f32.mrb[0].mxu0
        %v1312 = vadd.f32 0.0, %v1311
        %v1313 = vpop.f32.mrb[0].mxu0
        %v1314 = vadd.f32 0.0, %v1313
        %1315 = vmatprep.mubr.f32.mxu0 0.0
        %1316 = vmatmul.mubr.f32.gmra.mrb[0].mxu0 %v1019
        %v1317 = vpop.f32.mrb[0].mxu0
        %v1318 = vadd.f32 0.0, %v1317
        %v1319 = vpop.f32.mrb[0].mxu0
        %v1320 = vadd.f32 0.0, %v1319
        %1321 = vmatprep.mubr.f32.mxu0 0.0
        %1322 = vmatmul.mubr.f32.gmra.mrb[0].mxu0 %v1021
        %v1323 = vpop.f32.mrb[0].mxu0
        %v1324 = vadd.f32 0.0, %v1323
        %v1325 = vpop.f32.mrb[0].mxu0
        %v1326 = vadd.f32 0.0, %v1325
        %1327 = vmatprep.mubr.f32.mxu0 0.0
        %1328 = vmatmul.mubr.f32.gmra.mrb[0].mxu0 %v1023
        %v1329 = vpop.f32.mrb[0].mxu0
        %v1330 = vadd.f32 0.0, %v1329
        %v1331 = vpop.f32.mrb[0].mxu0
        %v1332 = vadd.f32 0.0, %v1331
        %1333 = vmatprep.mubr.f32.mxu0 0.0
        %1334 = vmatmul.mubr.f32.gmra.mrb[0].mxu0 %v1025
        %v1335 = vpop.f32.mrb[0].mxu0
        %v1336 = vadd.f32 0.0, %v1335
        %v1337 = vpop.f32.mrb[0].mxu0
        %v1338 = vadd.f32 0.0, %v1337
        %1339 = vmatprep.mubr.f32.mxu0 0.0
        %1340 = vmatmul.mubr.f32.gmra.mrb[0].mxu0 %v1027
        %v1341 = vpop.f32.mrb[0].mxu0
        %v1342 = vadd.f32 0.0, %v1341
        %v1343 = vpop.f32.mrb[0].mxu0
        %v1344 = vadd.f32 0.0, %v1343
        %1345 = vmatprep.mubr.f32.mxu0 0.0
        %1346 = vmatmul.mubr.f32.gmra.mrb[0].mxu0 %v1029
        %v1347 = vpop.f32.mrb[0].mxu0
        %v1348 = vadd.f32 0.0, %v1347
        %v1349 = vpop.f32.mrb[0].mxu0
        %v1350 = vadd.f32 0.0, %v1349
        %1351 = vdwg.mxu0
        %v1352 = vlaneseq
        %v1353 = vshrl.u32 %v1352, 7
        %v1354 = vadd.s32 %v1353, 8
        %v1355 = vadd.s32 %v1353, 16
        %v1356 = vadd.s32 %v1353, 24
        %v1357 = vadd.s32 %v1353, 32
        %v1358 = vadd.s32 %v1353, 40
        %v1359 = vadd.s32 %v1353, 48
        %v1360 = vadd.s32 %v1353, 56
        %v1361 = vadd.s32 %v1353, 64
        %v1362 = vadd.s32 %v1353, 72
        %v1363 = vadd.s32 %v1353, 80
        %v1364 = vadd.s32 %v1353, 88
        %v1365 = vadd.s32 %v1353, 96
        %v1366 = vadd.s32 %v1353, 104
        %v1367 = vadd.s32 %v1353, 112
        %v1368 = vadd.s32 %v1353, 120
        %v1369 = vadd.s32 %v1353, 128
        %v1370 = vadd.s32 %v1353, 136
        %v1371 = vadd.s32 %v1353, 144
        %v1372 = vadd.s32 %v1353, 152
        %v1373 = vadd.s32 %v1353, 160
        %v1374 = vadd.s32 %v1353, 168
        %v1375 = vadd.s32 %v1353, 176
        %v1376 = vadd.s32 %v1353, 184
        %v1377 = vadd.s32 %v1353, 192
        %v1378 = vadd.s32 %v1353, 200
        %v1379 = vadd.s32 %v1353, 208
        %v1380 = vadd.s32 %v1353, 216
        %v1381 = vadd.s32 %v1353, 224
        %v1382 = vadd.s32 %v1353, 232
        %v1383 = vadd.s32 %v1353, 240
        %v1384 = vadd.s32 %v1353, 248
        %v1385 = vlaneseq
        %v1386 = vand.u32 %v1385, 127
        %v1387 = vadd.s32 %v1386, 128
        %vm1388 = vcmp.le.s32.totalorder %v1386, %v1353
        %vm1389 = vcmp.le.s32.totalorder %v1387, %v1353
        %vm1390 = vcmp.le.s32.totalorder %v1386, %v1354
        %vm1391 = vcmp.le.s32.totalorder %v1387, %v1354
        %vm1392 = vcmp.le.s32.totalorder %v1386, %v1355
        %vm1393 = vcmp.le.s32.totalorder %v1387, %v1355
        %vm1394 = vcmp.le.s32.totalorder %v1386, %v1356
        %vm1395 = vcmp.le.s32.totalorder %v1387, %v1356
        %vm1396 = vcmp.le.s32.totalorder %v1386, %v1357
        %vm1397 = vcmp.le.s32.totalorder %v1387, %v1357
        %vm1398 = vcmp.le.s32.totalorder %v1386, %v1358
        %vm1399 = vcmp.le.s32.totalorder %v1387, %v1358
        %vm1400 = vcmp.le.s32.totalorder %v1386, %v1359
        %vm1401 = vcmp.le.s32.totalorder %v1387, %v1359
        %vm1402 = vcmp.le.s32.totalorder %v1386, %v1360
        %vm1403 = vcmp.le.s32.totalorder %v1387, %v1360
        %vm1404 = vcmp.le.s32.totalorder %v1386, %v1361
        %vm1405 = vcmp.le.s32.totalorder %v1387, %v1361
        %vm1406 = vcmp.le.s32.totalorder %v1386, %v1362
        %vm1407 = vcmp.le.s32.totalorder %v1387, %v1362
        %vm1408 = vcmp.le.s32.totalorder %v1386, %v1363
        %vm1409 = vcmp.le.s32.totalorder %v1387, %v1363
        %vm1410 = vcmp.le.s32.totalorder %v1386, %v1364
        %vm1411 = vcmp.le.s32.totalorder %v1387, %v1364
        %vm1412 = vcmp.le.s32.totalorder %v1386, %v1365
        %vm1413 = vcmp.le.s32.totalorder %v1387, %v1365
        %vm1414 = vcmp.le.s32.totalorder %v1386, %v1366
        %vm1415 = vcmp.le.s32.totalorder %v1387, %v1366
        %vm1416 = vcmp.le.s32.totalorder %v1386, %v1367
        %vm1417 = vcmp.le.s32.totalorder %v1387, %v1367
        %vm1418 = vcmp.le.s32.totalorder %v1386, %v1368
        %vm1419 = vcmp.le.s32.totalorder %v1387, %v1368
        %vm1420 = vcmp.le.s32.totalorder %v1386, %v1369
        %vm1421 = vcmp.le.s32.totalorder %v1387, %v1369
        %vm1422 = vcmp.le.s32.totalorder %v1386, %v1370
        %vm1423 = vcmp.le.s32.totalorder %v1387, %v1370
        %vm1424 = vcmp.le.s32.totalorder %v1386, %v1371
        %vm1425 = vcmp.le.s32.totalorder %v1387, %v1371
        %vm1426 = vcmp.le.s32.totalorder %v1386, %v1372
        %vm1427 = vcmp.le.s32.totalorder %v1387, %v1372
        %vm1428 = vcmp.le.s32.totalorder %v1386, %v1373
        %vm1429 = vcmp.le.s32.totalorder %v1387, %v1373
        %vm1430 = vcmp.le.s32.totalorder %v1386, %v1374
        %vm1431 = vcmp.le.s32.totalorder %v1387, %v1374
        %vm1432 = vcmp.le.s32.totalorder %v1386, %v1375
        %vm1433 = vcmp.le.s32.totalorder %v1387, %v1375
        %vm1434 = vcmp.le.s32.totalorder %v1386, %v1376
        %vm1435 = vcmp.le.s32.totalorder %v1387, %v1376
        %vm1436 = vcmp.le.s32.totalorder %v1386, %v1377
        %vm1437 = vcmp.le.s32.totalorder %v1387, %v1377
        %vm1438 = vcmp.le.s32.totalorder %v1386, %v1378
        %vm1439 = vcmp.le.s32.totalorder %v1387, %v1378
        %vm1440 = vcmp.le.s32.totalorder %v1386, %v1379
        %vm1441 = vcmp.le.s32.totalorder %v1387, %v1379
        %vm1442 = vcmp.le.s32.totalorder %v1386, %v1380
        %vm1443 = vcmp.le.s32.totalorder %v1387, %v1380
        %vm1444 = vcmp.le.s32.totalorder %v1386, %v1381
        %vm1445 = vcmp.le.s32.totalorder %v1387, %v1381
        %vm1446 = vcmp.le.s32.totalorder %v1386, %v1382
        %vm1447 = vcmp.le.s32.totalorder %v1387, %v1382
        %vm1448 = vcmp.le.s32.totalorder %v1386, %v1383
        %vm1449 = vcmp.le.s32.totalorder %v1387, %v1383
        %vm1450 = vcmp.le.s32.totalorder %v1386, %v1384
        %vm1451 = vcmp.le.s32.totalorder %v1387, %v1384
        %v1452 = vsel %vm1388, %v1162, -1e+30
        %v1453 = vsel %vm1389, %v1164, -1e+30
        %v1454 = vsel %vm1390, %v1168, -1e+30
        %v1455 = vsel %vm1391, %v1170, -1e+30
        %v1456 = vsel %vm1392, %v1174, -1e+30
        %v1457 = vsel %vm1393, %v1176, -1e+30
        %v1458 = vsel %vm1394, %v1180, -1e+30
        %v1459 = vsel %vm1395, %v1182, -1e+30
        %v1460 = vsel %vm1396, %v1186, -1e+30
        %v1461 = vsel %vm1397, %v1188, -1e+30
        %v1462 = vsel %vm1398, %v1192, -1e+30
        %v1463 = vsel %vm1399, %v1194, -1e+30
        %v1464 = vsel %vm1400, %v1198, -1e+30
        %v1465 = vsel %vm1401, %v1200, -1e+30
        %v1466 = vsel %vm1402, %v1204, -1e+30
        %v1467 = vsel %vm1403, %v1206, -1e+30
        %v1468 = vsel %vm1404, %v1210, -1e+30
        %v1469 = vsel %vm1405, %v1212, -1e+30
        %v1470 = vsel %vm1406, %v1216, -1e+30
        %v1471 = vsel %vm1407, %v1218, -1e+30
        %v1472 = vsel %vm1408, %v1222, -1e+30
        %v1473 = vsel %vm1409, %v1224, -1e+30
        %v1474 = vsel %vm1410, %v1228, -1e+30
        %v1475 = vsel %vm1411, %v1230, -1e+30
        %v1476 = vsel %vm1412, %v1234, -1e+30
        %v1477 = vsel %vm1413, %v1236, -1e+30
        %v1478 = vsel %vm1414, %v1240, -1e+30
        %v1479 = vsel %vm1415, %v1242, -1e+30
        %v1480 = vsel %vm1416, %v1246, -1e+30
        %v1481 = vsel %vm1417, %v1248, -1e+30
        %v1482 = vsel %vm1418, %v1252, -1e+30
        %v1483 = vsel %vm1419, %v1254, -1e+30
        %v1484 = vsel %vm1420, %v1258, -1e+30
        %v1485 = vsel %vm1421, %v1260, -1e+30
        %v1486 = vsel %vm1422, %v1264, -1e+30
        %v1487 = vsel %vm1423, %v1266, -1e+30
        %v1488 = vsel %vm1424, %v1270, -1e+30
        %v1489 = vsel %vm1425, %v1272, -1e+30
        %v1490 = vsel %vm1426, %v1276, -1e+30
        %v1491 = vsel %vm1427, %v1278, -1e+30
        %v1492 = vsel %vm1428, %v1282, -1e+30
        %v1493 = vsel %vm1429, %v1284, -1e+30
        %v1494 = vsel %vm1430, %v1288, -1e+30
        %v1495 = vsel %vm1431, %v1290, -1e+30
        %v1496 = vsel %vm1432, %v1294, -1e+30
        %v1497 = vsel %vm1433, %v1296, -1e+30
        %v1498 = vsel %vm1434, %v1300, -1e+30
        %v1499 = vsel %vm1435, %v1302, -1e+30
        %v1500 = vsel %vm1436, %v1306, -1e+30
        %v1501 = vsel %vm1437, %v1308, -1e+30
        %v1502 = vsel %vm1438, %v1312, -1e+30
        %v1503 = vsel %vm1439, %v1314, -1e+30
        %v1504 = vsel %vm1440, %v1318, -1e+30
        %v1505 = vsel %vm1441, %v1320, -1e+30
        %v1506 = vsel %vm1442, %v1324, -1e+30
        %v1507 = vsel %vm1443, %v1326, -1e+30
        %v1508 = vsel %vm1444, %v1330, -1e+30
        %v1509 = vsel %vm1445, %v1332, -1e+30
        %v1510 = vsel %vm1446, %v1336, -1e+30
        %v1511 = vsel %vm1447, %v1338, -1e+30
        %v1512 = vsel %vm1448, %v1342, -1e+30
        %v1513 = vsel %vm1449, %v1344, -1e+30
        %v1514 = vsel %vm1450, %v1348, -1e+30
        %v1515 = vsel %vm1451, %v1350, -1e+30
        %v1516 = vmax.f32 %v1452, %v1453
        %1517 = vmax.xlane.f32.xlu0 %v1516
        %v1518 = vpop.xlane.xlu0 %1517
        %v1519 = vmax.f32 %v1454, %v1455
        %1520 = vmax.xlane.f32.xlu0 %v1519
        %v1521 = vpop.xlane.xlu0 %1520
        %v1522 = vmax.f32 %v1456, %v1457
        %1523 = vmax.xlane.f32.xlu0 %v1522
        %v1524 = vpop.xlane.xlu0 %1523
        %v1525 = vmax.f32 %v1458, %v1459
        %1526 = vmax.xlane.f32.xlu0 %v1525
        %v1527 = vpop.xlane.xlu0 %1526
        %v1528 = vmax.f32 %v1460, %v1461
        %1529 = vmax.xlane.f32.xlu0 %v1528
        %v1530 = vpop.xlane.xlu0 %1529
        %v1531 = vmax.f32 %v1462, %v1463
        %1532 = vmax.xlane.f32.xlu0 %v1531
        %v1533 = vpop.xlane.xlu0 %1532
        %v1534 = vmax.f32 %v1464, %v1465
        %1535 = vmax.xlane.f32.xlu0 %v1534
        %v1536 = vpop.xlane.xlu0 %1535
        %v1537 = vmax.f32 %v1466, %v1467
        %1538 = vmax.xlane.f32.xlu0 %v1537
        %v1539 = vpop.xlane.xlu0 %1538
        %v1540 = vmax.f32 %v1468, %v1469
        %1541 = vmax.xlane.f32.xlu0 %v1540
        %v1542 = vpop.xlane.xlu0 %1541
        %v1543 = vmax.f32 %v1470, %v1471
        %1544 = vmax.xlane.f32.xlu0 %v1543
        %v1545 = vpop.xlane.xlu0 %1544
        %v1546 = vmax.f32 %v1472, %v1473
        %1547 = vmax.xlane.f32.xlu0 %v1546
        %v1548 = vpop.xlane.xlu0 %1547
        %v1549 = vmax.f32 %v1474, %v1475
        %1550 = vmax.xlane.f32.xlu0 %v1549
        %v1551 = vpop.xlane.xlu0 %1550
        %v1552 = vmax.f32 %v1476, %v1477
        %1553 = vmax.xlane.f32.xlu0 %v1552
        %v1554 = vpop.xlane.xlu0 %1553
        %v1555 = vmax.f32 %v1478, %v1479
        %1556 = vmax.xlane.f32.xlu0 %v1555
        %v1557 = vpop.xlane.xlu0 %1556
        %v1558 = vmax.f32 %v1480, %v1481
        %1559 = vmax.xlane.f32.xlu0 %v1558
        %v1560 = vpop.xlane.xlu0 %1559
        %v1561 = vmax.f32 %v1482, %v1483
        %1562 = vmax.xlane.f32.xlu0 %v1561
        %v1563 = vpop.xlane.xlu0 %1562
        %v1564 = vmax.f32 %v1484, %v1485
        %1565 = vmax.xlane.f32.xlu0 %v1564
        %v1566 = vpop.xlane.xlu0 %1565
        %v1567 = vmax.f32 %v1486, %v1487
        %1568 = vmax.xlane.f32.xlu0 %v1567
        %v1569 = vpop.xlane.xlu0 %1568
        %v1570 = vmax.f32 %v1488, %v1489
        %1571 = vmax.xlane.f32.xlu0 %v1570
        %v1572 = vpop.xlane.xlu0 %1571
        %v1573 = vmax.f32 %v1490, %v1491
        %1574 = vmax.xlane.f32.xlu0 %v1573
        %v1575 = vpop.xlane.xlu0 %1574
        %v1576 = vmax.f32 %v1492, %v1493
        %1577 = vmax.xlane.f32.xlu0 %v1576
        %v1578 = vpop.xlane.xlu0 %1577
        %v1579 = vmax.f32 %v1494, %v1495
        %1580 = vmax.xlane.f32.xlu0 %v1579
        %v1581 = vpop.xlane.xlu0 %1580
        %v1582 = vmax.f32 %v1496, %v1497
        %1583 = vmax.xlane.f32.xlu0 %v1582
        %v1584 = vpop.xlane.xlu0 %1583
        %v1585 = vmax.f32 %v1498, %v1499
        %1586 = vmax.xlane.f32.xlu0 %v1585
        %v1587 = vpop.xlane.xlu0 %1586
        %v1588 = vmax.f32 %v1500, %v1501
        %1589 = vmax.xlane.f32.xlu0 %v1588
        %v1590 = vpop.xlane.xlu0 %1589
        %v1591 = vmax.f32 %v1502, %v1503
        %1592 = vmax.xlane.f32.xlu0 %v1591
        %v1593 = vpop.xlane.xlu0 %1592
        %v1594 = vmax.f32 %v1504, %v1505
        %1595 = vmax.xlane.f32.xlu0 %v1594
        %v1596 = vpop.xlane.xlu0 %1595
        %v1597 = vmax.f32 %v1506, %v1507
        %1598 = vmax.xlane.f32.xlu0 %v1597
        %v1599 = vpop.xlane.xlu0 %1598
        %v1600 = vmax.f32 %v1508, %v1509
        %1601 = vmax.xlane.f32.xlu0 %v1600
        %v1602 = vpop.xlane.xlu0 %1601
        %v1603 = vmax.f32 %v1510, %v1511
        %1604 = vmax.xlane.f32.xlu0 %v1603
        %v1605 = vpop.xlane.xlu0 %1604
        %v1606 = vmax.f32 %v1512, %v1513
        %1607 = vmax.xlane.f32.xlu0 %v1606
        %v1608 = vpop.xlane.xlu0 %1607
        %v1609 = vmax.f32 %v1514, %v1515
        %1610 = vmax.xlane.f32.xlu0 %v1609
        %v1611 = vpop.xlane.xlu0 %1610
        %v1612 = vsub.f32 %v1452, %v1518
        %v1613 = vsub.f32 %v1453, %v1518
        %v1614 = vsub.f32 %v1454, %v1521
        %v1615 = vsub.f32 %v1455, %v1521
        %v1616 = vsub.f32 %v1456, %v1524
        %v1617 = vsub.f32 %v1457, %v1524
        %v1618 = vsub.f32 %v1458, %v1527
        %v1619 = vsub.f32 %v1459, %v1527
        %v1620 = vsub.f32 %v1460, %v1530
        %v1621 = vsub.f32 %v1461, %v1530
        %v1622 = vsub.f32 %v1462, %v1533
        %v1623 = vsub.f32 %v1463, %v1533
        %v1624 = vsub.f32 %v1464, %v1536
        %v1625 = vsub.f32 %v1465, %v1536
        %v1626 = vsub.f32 %v1466, %v1539
        %v1627 = vsub.f32 %v1467, %v1539
        %v1628 = vsub.f32 %v1468, %v1542
        %v1629 = vsub.f32 %v1469, %v1542
        %v1630 = vsub.f32 %v1470, %v1545
        %v1631 = vsub.f32 %v1471, %v1545
        %v1632 = vsub.f32 %v1472, %v1548
        %v1633 = vsub.f32 %v1473, %v1548
        %v1634 = vsub.f32 %v1474, %v1551
        %v1635 = vsub.f32 %v1475, %v1551
        %v1636 = vsub.f32 %v1476, %v1554
        %v1637 = vsub.f32 %v1477, %v1554
        %v1638 = vsub.f32 %v1478, %v1557
        %v1639 = vsub.f32 %v1479, %v1557
        %v1640 = vsub.f32 %v1480, %v1560
        %v1641 = vsub.f32 %v1481, %v1560
        %v1642 = vsub.f32 %v1482, %v1563
        %v1643 = vsub.f32 %v1483, %v1563
        %v1644 = vsub.f32 %v1484, %v1566
        %v1645 = vsub.f32 %v1485, %v1566
        %v1646 = vsub.f32 %v1486, %v1569
        %v1647 = vsub.f32 %v1487, %v1569
        %v1648 = vsub.f32 %v1488, %v1572
        %v1649 = vsub.f32 %v1489, %v1572
        %v1650 = vsub.f32 %v1490, %v1575
        %v1651 = vsub.f32 %v1491, %v1575
        %v1652 = vsub.f32 %v1492, %v1578
        %v1653 = vsub.f32 %v1493, %v1578
        %v1654 = vsub.f32 %v1494, %v1581
        %v1655 = vsub.f32 %v1495, %v1581
        %v1656 = vsub.f32 %v1496, %v1584
        %v1657 = vsub.f32 %v1497, %v1584
        %v1658 = vsub.f32 %v1498, %v1587
        %v1659 = vsub.f32 %v1499, %v1587
        %v1660 = vsub.f32 %v1500, %v1590
        %v1661 = vsub.f32 %v1501, %v1590
        %v1662 = vsub.f32 %v1502, %v1593
        %v1663 = vsub.f32 %v1503, %v1593
        %v1664 = vsub.f32 %v1504, %v1596
        %v1665 = vsub.f32 %v1505, %v1596
        %v1666 = vsub.f32 %v1506, %v1599
        %v1667 = vsub.f32 %v1507, %v1599
        %v1668 = vsub.f32 %v1508, %v1602
        %v1669 = vsub.f32 %v1509, %v1602
        %v1670 = vsub.f32 %v1510, %v1605
        %v1671 = vsub.f32 %v1511, %v1605
        %v1672 = vsub.f32 %v1512, %v1608
        %v1673 = vsub.f32 %v1513, %v1608
        %v1674 = vsub.f32 %v1514, %v1611
        %v1675 = vsub.f32 %v1515, %v1611
        %v1676 = vmul.f32 %v1612, 1.442695
        %v1677 = vpow.pop %v1676
        %v1678 = vmul.f32 %v1613, 1.442695
        %v1679 = vpow.pop %v1678
        %v1680 = vmul.f32 %v1614, 1.442695
        %v1681 = vpow.pop %v1680
        %v1682 = vmul.f32 %v1615, 1.442695
        %v1683 = vpow.pop %v1682
        %v1684 = vmul.f32 %v1616, 1.442695
        %v1685 = vpow.pop %v1684
        %v1686 = vmul.f32 %v1617, 1.442695
        %v1687 = vpow.pop %v1686
        %v1688 = vmul.f32 %v1618, 1.442695
        %v1689 = vpow.pop %v1688
        %v1690 = vmul.f32 %v1619, 1.442695
        %v1691 = vpow.pop %v1690
        %v1692 = vmul.f32 %v1620, 1.442695
        %v1693 = vpow.pop %v1692
        %v1694 = vmul.f32 %v1621, 1.442695
        %v1695 = vpow.pop %v1694
        %v1696 = vmul.f32 %v1622, 1.442695
        %v1697 = vpow.pop %v1696
        %v1698 = vmul.f32 %v1623, 1.442695
        %v1699 = vpow.pop %v1698
        %v1700 = vmul.f32 %v1624, 1.442695
        %v1701 = vpow.pop %v1700
        %v1702 = vmul.f32 %v1625, 1.442695
        %v1703 = vpow.pop %v1702
        %v1704 = vmul.f32 %v1626, 1.442695
        %v1705 = vpow.pop %v1704
        %v1706 = vmul.f32 %v1627, 1.442695
        %v1707 = vpow.pop %v1706
        %v1708 = vmul.f32 %v1628, 1.442695
        %v1709 = vpow.pop %v1708
        %v1710 = vmul.f32 %v1629, 1.442695
        %v1711 = vpow.pop %v1710
        %v1712 = vmul.f32 %v1630, 1.442695
        %v1713 = vpow.pop %v1712
        %v1714 = vmul.f32 %v1631, 1.442695
        %v1715 = vpow.pop %v1714
        %v1716 = vmul.f32 %v1632, 1.442695
        %v1717 = vpow.pop %v1716
        %v1718 = vmul.f32 %v1633, 1.442695
        %v1719 = vpow.pop %v1718
        %v1720 = vmul.f32 %v1634, 1.442695
        %v1721 = vpow.pop %v1720
        %v1722 = vmul.f32 %v1635, 1.442695
        %v1723 = vpow.pop %v1722
        %v1724 = vmul.f32 %v1636, 1.442695
        %v1725 = vpow.pop %v1724
        %v1726 = vmul.f32 %v1637, 1.442695
        %v1727 = vpow.pop %v1726
        %v1728 = vmul.f32 %v1638, 1.442695
        %v1729 = vpow.pop %v1728
        %v1730 = vmul.f32 %v1639, 1.442695
        %v1731 = vpow.pop %v1730
        %v1732 = vmul.f32 %v1640, 1.442695
        %v1733 = vpow.pop %v1732
        %v1734 = vmul.f32 %v1641, 1.442695
        %v1735 = vpow.pop %v1734
        %v1736 = vmul.f32 %v1642, 1.442695
        %v1737 = vpow.pop %v1736
        %v1738 = vmul.f32 %v1643, 1.442695
        %v1739 = vpow.pop %v1738
        %v1740 = vmul.f32 %v1644, 1.442695
        %v1741 = vpow.pop %v1740
        %v1742 = vmul.f32 %v1645, 1.442695
        %v1743 = vpow.pop %v1742
        %v1744 = vmul.f32 %v1646, 1.442695
        %v1745 = vpow.pop %v1744
        %v1746 = vmul.f32 %v1647, 1.442695
        %v1747 = vpow.pop %v1746
        %v1748 = vmul.f32 %v1648, 1.442695
        %v1749 = vpow.pop %v1748
        %v1750 = vmul.f32 %v1649, 1.442695
        %v1751 = vpow.pop %v1750
        %v1752 = vmul.f32 %v1650, 1.442695
        %v1753 = vpow.pop %v1752
        %v1754 = vmul.f32 %v1651, 1.442695
        %v1755 = vpow.pop %v1754
        %v1756 = vmul.f32 %v1652, 1.442695
        %v1757 = vpow.pop %v1756
        %v1758 = vmul.f32 %v1653, 1.442695
        %v1759 = vpow.pop %v1758
        %v1760 = vmul.f32 %v1654, 1.442695
        %v1761 = vpow.pop %v1760
        %v1762 = vmul.f32 %v1655, 1.442695
        %v1763 = vpow.pop %v1762
        %v1764 = vmul.f32 %v1656, 1.442695
        %v1765 = vpow.pop %v1764
        %v1766 = vmul.f32 %v1657, 1.442695
        %v1767 = vpow.pop %v1766
        %v1768 = vmul.f32 %v1658, 1.442695
        %v1769 = vpow.pop %v1768
        %v1770 = vmul.f32 %v1659, 1.442695
        %v1771 = vpow.pop %v1770
        %v1772 = vmul.f32 %v1660, 1.442695
        %v1773 = vpow.pop %v1772
        %v1774 = vmul.f32 %v1661, 1.442695
        %v1775 = vpow.pop %v1774
        %v1776 = vmul.f32 %v1662, 1.442695
        %v1777 = vpow.pop %v1776
        %v1778 = vmul.f32 %v1663, 1.442695
        %v1779 = vpow.pop %v1778
        %v1780 = vmul.f32 %v1664, 1.442695
        %v1781 = vpow.pop %v1780
        %v1782 = vmul.f32 %v1665, 1.442695
        %v1783 = vpow.pop %v1782
        %v1784 = vmul.f32 %v1666, 1.442695
        %v1785 = vpow.pop %v1784
        %v1786 = vmul.f32 %v1667, 1.442695
        %v1787 = vpow.pop %v1786
        %v1788 = vmul.f32 %v1668, 1.442695
        %v1789 = vpow.pop %v1788
        %v1790 = vmul.f32 %v1669, 1.442695
        %v1791 = vpow.pop %v1790
        %v1792 = vmul.f32 %v1670, 1.442695
        %v1793 = vpow.pop %v1792
        %v1794 = vmul.f32 %v1671, 1.442695
        %v1795 = vpow.pop %v1794
        %v1796 = vmul.f32 %v1672, 1.442695
        %v1797 = vpow.pop %v1796
        %v1798 = vmul.f32 %v1673, 1.442695
        %v1799 = vpow.pop %v1798
        %v1800 = vmul.f32 %v1674, 1.442695
        %v1801 = vpow.pop %v1800
        %v1802 = vmul.f32 %v1675, 1.442695
        %v1803 = vpow.pop %v1802
        %v1804 = vadd.f32 %v1677, %v1679
        %1805 = vadd.xlane.f32.xlu0 %v1804
        %v1806 = vpop.xlane.xlu0 %1805
        %v1807 = vadd.f32 %v1681, %v1683
        %1808 = vadd.xlane.f32.xlu0 %v1807
        %v1809 = vpop.xlane.xlu0 %1808
        %v1810 = vadd.f32 %v1685, %v1687
        %1811 = vadd.xlane.f32.xlu0 %v1810
        %v1812 = vpop.xlane.xlu0 %1811
        %v1813 = vadd.f32 %v1689, %v1691
        %1814 = vadd.xlane.f32.xlu0 %v1813
        %v1815 = vpop.xlane.xlu0 %1814
        %v1816 = vadd.f32 %v1693, %v1695
        %1817 = vadd.xlane.f32.xlu0 %v1816
        %v1818 = vpop.xlane.xlu0 %1817
        %v1819 = vadd.f32 %v1697, %v1699
        %1820 = vadd.xlane.f32.xlu0 %v1819
        %v1821 = vpop.xlane.xlu0 %1820
        %v1822 = vadd.f32 %v1701, %v1703
        %1823 = vadd.xlane.f32.xlu0 %v1822
        %v1824 = vpop.xlane.xlu0 %1823
        %v1825 = vadd.f32 %v1705, %v1707
        %1826 = vadd.xlane.f32.xlu0 %v1825
        %v1827 = vpop.xlane.xlu0 %1826
        %v1828 = vadd.f32 %v1709, %v1711
        %1829 = vadd.xlane.f32.xlu0 %v1828
        %v1830 = vpop.xlane.xlu0 %1829
        %v1831 = vadd.f32 %v1713, %v1715
        %1832 = vadd.xlane.f32.xlu0 %v1831
        %v1833 = vpop.xlane.xlu0 %1832
        %v1834 = vadd.f32 %v1717, %v1719
        %1835 = vadd.xlane.f32.xlu0 %v1834
        %v1836 = vpop.xlane.xlu0 %1835
        %v1837 = vadd.f32 %v1721, %v1723
        %1838 = vadd.xlane.f32.xlu0 %v1837
        %v1839 = vpop.xlane.xlu0 %1838
        %v1840 = vadd.f32 %v1725, %v1727
        %1841 = vadd.xlane.f32.xlu0 %v1840
        %v1842 = vpop.xlane.xlu0 %1841
        %v1843 = vadd.f32 %v1729, %v1731
        %1844 = vadd.xlane.f32.xlu0 %v1843
        %v1845 = vpop.xlane.xlu0 %1844
        %v1846 = vadd.f32 %v1733, %v1735
        %1847 = vadd.xlane.f32.xlu0 %v1846
        %v1848 = vpop.xlane.xlu0 %1847
        %v1849 = vadd.f32 %v1737, %v1739
        %1850 = vadd.xlane.f32.xlu0 %v1849
        %v1851 = vpop.xlane.xlu0 %1850
        %v1852 = vadd.f32 %v1741, %v1743
        %1853 = vadd.xlane.f32.xlu0 %v1852
        %v1854 = vpop.xlane.xlu0 %1853
        %v1855 = vadd.f32 %v1745, %v1747
        %1856 = vadd.xlane.f32.xlu0 %v1855
        %v1857 = vpop.xlane.xlu0 %1856
        %v1858 = vadd.f32 %v1749, %v1751
        %1859 = vadd.xlane.f32.xlu0 %v1858
        %v1860 = vpop.xlane.xlu0 %1859
        %v1861 = vadd.f32 %v1753, %v1755
        %1862 = vadd.xlane.f32.xlu0 %v1861
        %v1863 = vpop.xlane.xlu0 %1862
        %v1864 = vadd.f32 %v1757, %v1759
        %1865 = vadd.xlane.f32.xlu0 %v1864
        %v1866 = vpop.xlane.xlu0 %1865
        %v1867 = vadd.f32 %v1761, %v1763
        %1868 = vadd.xlane.f32.xlu0 %v1867
        %v1869 = vpop.xlane.xlu0 %1868
        %v1870 = vadd.f32 %v1765, %v1767
        %1871 = vadd.xlane.f32.xlu0 %v1870
        %v1872 = vpop.xlane.xlu0 %1871
        %v1873 = vadd.f32 %v1769, %v1771
        %1874 = vadd.xlane.f32.xlu0 %v1873
        %v1875 = vpop.xlane.xlu0 %1874
        %v1876 = vadd.f32 %v1773, %v1775
        %1877 = vadd.xlane.f32.xlu0 %v1876
        %v1878 = vpop.xlane.xlu0 %1877
        %v1879 = vadd.f32 %v1777, %v1779
        %1880 = vadd.xlane.f32.xlu0 %v1879
        %v1881 = vpop.xlane.xlu0 %1880
        %v1882 = vadd.f32 %v1781, %v1783
        %1883 = vadd.xlane.f32.xlu0 %v1882
        %v1884 = vpop.xlane.xlu0 %1883
        %v1885 = vadd.f32 %v1785, %v1787
        %1886 = vadd.xlane.f32.xlu0 %v1885
        %v1887 = vpop.xlane.xlu0 %1886
        %v1888 = vadd.f32 %v1789, %v1791
        %1889 = vadd.xlane.f32.xlu0 %v1888
        %v1890 = vpop.xlane.xlu0 %1889
        %v1891 = vadd.f32 %v1793, %v1795
        %1892 = vadd.xlane.f32.xlu0 %v1891
        %v1893 = vpop.xlane.xlu0 %1892
        %v1894 = vadd.f32 %v1797, %v1799
        %1895 = vadd.xlane.f32.xlu0 %v1894
        %v1896 = vpop.xlane.xlu0 %1895
        %v1897 = vadd.f32 %v1801, %v1803
        %1898 = vadd.xlane.f32.xlu0 %v1897
        %v1899 = vpop.xlane.xlu0 %1898
        %v1900 = vrcp.pop %v1806
        %v1901 = vmul.f32 1.0, %v1900
        %v1902 = vrcp.pop %v1809
        %v1903 = vmul.f32 1.0, %v1902
        %v1904 = vrcp.pop %v1812
        %v1905 = vmul.f32 1.0, %v1904
        %v1906 = vrcp.pop %v1815
        %v1907 = vmul.f32 1.0, %v1906
        %v1908 = vrcp.pop %v1818
        %v1909 = vmul.f32 1.0, %v1908
        %v1910 = vrcp.pop %v1821
        %v1911 = vmul.f32 1.0, %v1910
        %v1912 = vrcp.pop %v1824
        %v1913 = vmul.f32 1.0, %v1912
        %v1914 = vrcp.pop %v1827
        %v1915 = vmul.f32 1.0, %v1914
        %v1916 = vrcp.pop %v1830
        %v1917 = vmul.f32 1.0, %v1916
        %v1918 = vrcp.pop %v1833
        %v1919 = vmul.f32 1.0, %v1918
        %v1920 = vrcp.pop %v1836
        %v1921 = vmul.f32 1.0, %v1920
        %v1922 = vrcp.pop %v1839
        %v1923 = vmul.f32 1.0, %v1922
        %v1924 = vrcp.pop %v1842
        %v1925 = vmul.f32 1.0, %v1924
        %v1926 = vrcp.pop %v1845
        %v1927 = vmul.f32 1.0, %v1926
        %v1928 = vrcp.pop %v1848
        %v1929 = vmul.f32 1.0, %v1928
        %v1930 = vrcp.pop %v1851
        %v1931 = vmul.f32 1.0, %v1930
        %v1932 = vrcp.pop %v1854
        %v1933 = vmul.f32 1.0, %v1932
        %v1934 = vrcp.pop %v1857
        %v1935 = vmul.f32 1.0, %v1934
        %v1936 = vrcp.pop %v1860
        %v1937 = vmul.f32 1.0, %v1936
        %v1938 = vrcp.pop %v1863
        %v1939 = vmul.f32 1.0, %v1938
        %v1940 = vrcp.pop %v1866
        %v1941 = vmul.f32 1.0, %v1940
        %v1942 = vrcp.pop %v1869
        %v1943 = vmul.f32 1.0, %v1942
        %v1944 = vrcp.pop %v1872
        %v1945 = vmul.f32 1.0, %v1944
        %v1946 = vrcp.pop %v1875
        %v1947 = vmul.f32 1.0, %v1946
        %v1948 = vrcp.pop %v1878
        %v1949 = vmul.f32 1.0, %v1948
        %v1950 = vrcp.pop %v1881
        %v1951 = vmul.f32 1.0, %v1950
        %v1952 = vrcp.pop %v1884
        %v1953 = vmul.f32 1.0, %v1952
        %v1954 = vrcp.pop %v1887
        %v1955 = vmul.f32 1.0, %v1954
        %v1956 = vrcp.pop %v1890
        %v1957 = vmul.f32 1.0, %v1956
        %v1958 = vrcp.pop %v1893
        %v1959 = vmul.f32 1.0, %v1958
        %v1960 = vrcp.pop %v1896
        %v1961 = vmul.f32 1.0, %v1960
        %v1962 = vrcp.pop %v1899
        %v1963 = vmul.f32 1.0, %v1962
        %v1964 = vmul.f32 %v1677, %v1901
        %v1965 = vmul.f32 %v1679, %v1901
        %v1966 = vmul.f32 %v1681, %v1903
        %v1967 = vmul.f32 %v1683, %v1903
        %v1968 = vmul.f32 %v1685, %v1905
        %v1969 = vmul.f32 %v1687, %v1905
        %v1970 = vmul.f32 %v1689, %v1907
        %v1971 = vmul.f32 %v1691, %v1907
        %v1972 = vmul.f32 %v1693, %v1909
        %v1973 = vmul.f32 %v1695, %v1909
        %v1974 = vmul.f32 %v1697, %v1911
        %v1975 = vmul.f32 %v1699, %v1911
        %v1976 = vmul.f32 %v1701, %v1913
        %v1977 = vmul.f32 %v1703, %v1913
        %v1978 = vmul.f32 %v1705, %v1915
        %v1979 = vmul.f32 %v1707, %v1915
        %v1980 = vmul.f32 %v1709, %v1917
        %v1981 = vmul.f32 %v1711, %v1917
        %v1982 = vmul.f32 %v1713, %v1919
        %v1983 = vmul.f32 %v1715, %v1919
        %v1984 = vmul.f32 %v1717, %v1921
        %v1985 = vmul.f32 %v1719, %v1921
        %v1986 = vmul.f32 %v1721, %v1923
        %v1987 = vmul.f32 %v1723, %v1923
        %v1988 = vmul.f32 %v1725, %v1925
        %v1989 = vmul.f32 %v1727, %v1925
        %v1990 = vmul.f32 %v1729, %v1927
        %v1991 = vmul.f32 %v1731, %v1927
        %v1992 = vmul.f32 %v1733, %v1929
        %v1993 = vmul.f32 %v1735, %v1929
        %v1994 = vmul.f32 %v1737, %v1931
        %v1995 = vmul.f32 %v1739, %v1931
        %v1996 = vmul.f32 %v1741, %v1933
        %v1997 = vmul.f32 %v1743, %v1933
        %v1998 = vmul.f32 %v1745, %v1935
        %v1999 = vmul.f32 %v1747, %v1935
        %v2000 = vmul.f32 %v1749, %v1937
        %v2001 = vmul.f32 %v1751, %v1937
        %v2002 = vmul.f32 %v1753, %v1939
        %v2003 = vmul.f32 %v1755, %v1939
        %v2004 = vmul.f32 %v1757, %v1941
        %v2005 = vmul.f32 %v1759, %v1941
        %v2006 = vmul.f32 %v1761, %v1943
        %v2007 = vmul.f32 %v1763, %v1943
        %v2008 = vmul.f32 %v1765, %v1945
        %v2009 = vmul.f32 %v1767, %v1945
        %v2010 = vmul.f32 %v1769, %v1947
        %v2011 = vmul.f32 %v1771, %v1947
        %v2012 = vmul.f32 %v1773, %v1949
        %v2013 = vmul.f32 %v1775, %v1949
        %v2014 = vmul.f32 %v1777, %v1951
        %v2015 = vmul.f32 %v1779, %v1951
        %v2016 = vmul.f32 %v1781, %v1953
        %v2017 = vmul.f32 %v1783, %v1953
        %v2018 = vmul.f32 %v1785, %v1955
        %v2019 = vmul.f32 %v1787, %v1955
        %v2020 = vmul.f32 %v1789, %v1957
        %v2021 = vmul.f32 %v1791, %v1957
        %v2022 = vmul.f32 %v1793, %v1959
        %v2023 = vmul.f32 %v1795, %v1959
        %v2024 = vmul.f32 %v1797, %v1961
        %v2025 = vmul.f32 %v1799, %v1961
        %v2026 = vmul.f32 %v1801, %v1963
        %v2027 = vmul.f32 %v1803, %v1963
        %2028 = vmatprep.subr.mxu0 0.0
        %2029 = vmatpush1.msra.mxu0 %v682
        %2030 = vmatprep.subr.mxu0 0.0
        %2031 = vmatpush1.msra.mxu0 %v688
        %2032 = vmatprep.subr.mxu0 0.0
        %2033 = vmatpush1.msra.mxu0 %v694
        %2034 = vmatprep.subr.mxu0 0.0
        %2035 = vmatpush1.msra.mxu0 %v700
        %2036 = vmatprep.subr.mxu0 0.0
        %2037 = vmatpush1.msra.mxu0 %v706
        %2038 = vmatprep.subr.mxu0 0.0
        %2039 = vmatpush1.msra.mxu0 %v712
        %2040 = vmatprep.subr.mxu0 0.0
        %2041 = vmatpush1.msra.mxu0 %v718
        %2042 = vmatprep.subr.mxu0 0.0
        %2043 = vmatpush1.msra.mxu0 %v724
        %2044 = vmatprep.subr.mxu0 0.0
        %2045 = vmatpush1.msra.mxu0 %v730
        %2046 = vmatprep.subr.mxu0 0.0
        %2047 = vmatpush1.msra.mxu0 %v736
        %2048 = vmatprep.subr.mxu0 0.0
        %2049 = vmatpush1.msra.mxu0 %v742
        %2050 = vmatprep.subr.mxu0 0.0
        %2051 = vmatpush1.msra.mxu0 %v748
        %2052 = vmatprep.subr.mxu0 0.0
        %2053 = vmatpush1.msra.mxu0 %v754
        %2054 = vmatprep.subr.mxu0 0.0
        %2055 = vmatpush1.msra.mxu0 %v760
        %2056 = vmatprep.subr.mxu0 0.0
        %2057 = vmatpush1.msra.mxu0 %v766
        %2058 = vmatprep.subr.mxu0 0.0
        %2059 = vmatpush1.msra.mxu0 %v772
        %2060 = vmatprep.subr.mxu0 0.0
        %2061 = vmatpush1.msra.mxu0 %v778
        %2062 = vmatprep.subr.mxu0 0.0
        %2063 = vmatpush1.msra.mxu0 %v784
        %2064 = vmatprep.subr.mxu0 0.0
        %2065 = vmatpush1.msra.mxu0 %v790
        %2066 = vmatprep.subr.mxu0 0.0
        %2067 = vmatpush1.msra.mxu0 %v796
        %2068 = vmatprep.subr.mxu0 0.0
        %2069 = vmatpush1.msra.mxu0 %v802
        %2070 = vmatprep.subr.mxu0 0.0
        %2071 = vmatpush1.msra.mxu0 %v808
        %2072 = vmatprep.subr.mxu0 0.0
        %2073 = vmatpush1.msra.mxu0 %v814
        %2074 = vmatprep.subr.mxu0 0.0
        %2075 = vmatpush1.msra.mxu0 %v820
        %2076 = vmatprep.subr.mxu0 0.0
        %2077 = vmatpush1.msra.mxu0 %v826
        %2078 = vmatprep.subr.mxu0 0.0
        %2079 = vmatpush1.msra.mxu0 %v832
        %2080 = vmatprep.subr.mxu0 0.0
        %2081 = vmatpush1.msra.mxu0 %v838
        %2082 = vmatprep.subr.mxu0 0.0
        %2083 = vmatpush1.msra.mxu0 %v844
        %2084 = vmatprep.subr.mxu0 0.0
        %2085 = vmatpush1.msra.mxu0 %v850
        %2086 = vmatprep.subr.mxu0 0.0
        %2087 = vmatpush1.msra.mxu0 %v856
        %2088 = vmatprep.subr.mxu0 0.0
        %2089 = vmatpush1.msra.mxu0 %v862
        %2090 = vmatprep.subr.mxu0 0.0
        %2091 = vmatpush1.msra.mxu0 %v868
        %2092 = vmatprep.mubr.f32.mxu0 %v1965
        %2093 = vmatmul.mubr.f32.gmra.mrb[0].mxu0 %v1964
        %v2094 = vpop.f32.mrb[0].mxu0
        %v2095 = vadd.f32 0.0, %v2094
        %v2096 = vpop.f32.mrb[0].mxu0
        %2097 = vmatprep.mubr.f32.mxu0 %v1967
        %2098 = vmatmul.mubr.f32.gmra.mrb[0].mxu0 %v1966
        %v2099 = vpop.f32.mrb[0].mxu0
        %v2100 = vadd.f32 0.0, %v2099
        %v2101 = vpop.f32.mrb[0].mxu0
        %2102 = vmatprep.mubr.f32.mxu0 %v1969
        %2103 = vmatmul.mubr.f32.gmra.mrb[0].mxu0 %v1968
        %v2104 = vpop.f32.mrb[0].mxu0
        %v2105 = vadd.f32 0.0, %v2104
        %v2106 = vpop.f32.mrb[0].mxu0
        %2107 = vmatprep.mubr.f32.mxu0 %v1971
        %2108 = vmatmul.mubr.f32.gmra.mrb[0].mxu0 %v1970
        %v2109 = vpop.f32.mrb[0].mxu0
        %v2110 = vadd.f32 0.0, %v2109
        %v2111 = vpop.f32.mrb[0].mxu0
        %2112 = vmatprep.mubr.f32.mxu0 %v1973
        %2113 = vmatmul.mubr.f32.gmra.mrb[0].mxu0 %v1972
        %v2114 = vpop.f32.mrb[0].mxu0
        %v2115 = vadd.f32 0.0, %v2114
        %v2116 = vpop.f32.mrb[0].mxu0
        %2117 = vmatprep.mubr.f32.mxu0 %v1975
        %2118 = vmatmul.mubr.f32.gmra.mrb[0].mxu0 %v1974
        %v2119 = vpop.f32.mrb[0].mxu0
        %v2120 = vadd.f32 0.0, %v2119
        %v2121 = vpop.f32.mrb[0].mxu0
        %2122 = vmatprep.mubr.f32.mxu0 %v1977
        %2123 = vmatmul.mubr.f32.gmra.mrb[0].mxu0 %v1976
        %v2124 = vpop.f32.mrb[0].mxu0
        %v2125 = vadd.f32 0.0, %v2124
        %v2126 = vpop.f32.mrb[0].mxu0
        %2127 = vmatprep.mubr.f32.mxu0 %v1979
        %2128 = vmatmul.mubr.f32.gmra.mrb[0].mxu0 %v1978
        %v2129 = vpop.f32.mrb[0].mxu0
        %v2130 = vadd.f32 0.0, %v2129
        %v2131 = vpop.f32.mrb[0].mxu0
        %2132 = vmatprep.mubr.f32.mxu0 %v1981
        %2133 = vmatmul.mubr.f32.gmra.mrb[0].mxu0 %v1980
        %v2134 = vpop.f32.mrb[0].mxu0
        %v2135 = vadd.f32 0.0, %v2134
        %v2136 = vpop.f32.mrb[0].mxu0
        %2137 = vmatprep.mubr.f32.mxu0 %v1983
        %2138 = vmatmul.mubr.f32.gmra.mrb[0].mxu0 %v1982
        %v2139 = vpop.f32.mrb[0].mxu0
        %v2140 = vadd.f32 0.0, %v2139
        %v2141 = vpop.f32.mrb[0].mxu0
        %2142 = vmatprep.mubr.f32.mxu0 %v1985
        %2143 = vmatmul.mubr.f32.gmra.mrb[0].mxu0 %v1984
        %v2144 = vpop.f32.mrb[0].mxu0
        %v2145 = vadd.f32 0.0, %v2144
        %v2146 = vpop.f32.mrb[0].mxu0
        %2147 = vmatprep.mubr.f32.mxu0 %v1987
        %2148 = vmatmul.mubr.f32.gmra.mrb[0].mxu0 %v1986
        %v2149 = vpop.f32.mrb[0].mxu0
        %v2150 = vadd.f32 0.0, %v2149
        %v2151 = vpop.f32.mrb[0].mxu0
        %2152 = vmatprep.mubr.f32.mxu0 %v1989
        %2153 = vmatmul.mubr.f32.gmra.mrb[0].mxu0 %v1988
        %v2154 = vpop.f32.mrb[0].mxu0
        %v2155 = vadd.f32 0.0, %v2154
        %v2156 = vpop.f32.mrb[0].mxu0
        %2157 = vmatprep.mubr.f32.mxu0 %v1991
        %2158 = vmatmul.mubr.f32.gmra.mrb[0].mxu0 %v1990
        %v2159 = vpop.f32.mrb[0].mxu0
        %v2160 = vadd.f32 0.0, %v2159
        %v2161 = vpop.f32.mrb[0].mxu0
        %2162 = vmatprep.mubr.f32.mxu0 %v1993
        %2163 = vmatmul.mubr.f32.gmra.mrb[0].mxu0 %v1992
        %v2164 = vpop.f32.mrb[0].mxu0
        %v2165 = vadd.f32 0.0, %v2164
        %v2166 = vpop.f32.mrb[0].mxu0
        %2167 = vmatprep.mubr.f32.mxu0 %v1995
        %2168 = vmatmul.mubr.f32.gmra.mrb[0].mxu0 %v1994
        %v2169 = vpop.f32.mrb[0].mxu0
        %v2170 = vadd.f32 0.0, %v2169
        %v2171 = vpop.f32.mrb[0].mxu0
        %2172 = vmatprep.mubr.f32.mxu0 %v1997
        %2173 = vmatmul.mubr.f32.gmra.mrb[0].mxu0 %v1996
        %v2174 = vpop.f32.mrb[0].mxu0
        %v2175 = vadd.f32 0.0, %v2174
        %v2176 = vpop.f32.mrb[0].mxu0
        %2177 = vmatprep.mubr.f32.mxu0 %v1999
        %2178 = vmatmul.mubr.f32.gmra.mrb[0].mxu0 %v1998
        %v2179 = vpop.f32.mrb[0].mxu0
        %v2180 = vadd.f32 0.0, %v2179
        %v2181 = vpop.f32.mrb[0].mxu0
        %2182 = vmatprep.mubr.f32.mxu0 %v2001
        %2183 = vmatmul.mubr.f32.gmra.mrb[0].mxu0 %v2000
        %v2184 = vpop.f32.mrb[0].mxu0
        %v2185 = vadd.f32 0.0, %v2184
        %v2186 = vpop.f32.mrb[0].mxu0
        %2187 = vmatprep.mubr.f32.mxu0 %v2003
        %2188 = vmatmul.mubr.f32.gmra.mrb[0].mxu0 %v2002
        %v2189 = vpop.f32.mrb[0].mxu0
        %v2190 = vadd.f32 0.0, %v2189
        %v2191 = vpop.f32.mrb[0].mxu0
        %2192 = vmatprep.mubr.f32.mxu0 %v2005
        %2193 = vmatmul.mubr.f32.gmra.mrb[0].mxu0 %v2004
        %v2194 = vpop.f32.mrb[0].mxu0
        %v2195 = vadd.f32 0.0, %v2194
        %v2196 = vpop.f32.mrb[0].mxu0
        %2197 = vmatprep.mubr.f32.mxu0 %v2007
        %2198 = vmatmul.mubr.f32.gmra.mrb[0].mxu0 %v2006
        %v2199 = vpop.f32.mrb[0].mxu0
        %v2200 = vadd.f32 0.0, %v2199
        %v2201 = vpop.f32.mrb[0].mxu0
        %2202 = vmatprep.mubr.f32.mxu0 %v2009
        %2203 = vmatmul.mubr.f32.gmra.mrb[0].mxu0 %v2008
        %v2204 = vpop.f32.mrb[0].mxu0
        %v2205 = vadd.f32 0.0, %v2204
        %v2206 = vpop.f32.mrb[0].mxu0
        %2207 = vmatprep.mubr.f32.mxu0 %v2011
        %2208 = vmatmul.mubr.f32.gmra.mrb[0].mxu0 %v2010
        %v2209 = vpop.f32.mrb[0].mxu0
        %v2210 = vadd.f32 0.0, %v2209
        %v2211 = vpop.f32.mrb[0].mxu0
        %2212 = vmatprep.mubr.f32.mxu0 %v2013
        %2213 = vmatmul.mubr.f32.gmra.mrb[0].mxu0 %v2012
        %v2214 = vpop.f32.mrb[0].mxu0
        %v2215 = vadd.f32 0.0, %v2214
        %v2216 = vpop.f32.mrb[0].mxu0
        %2217 = vmatprep.mubr.f32.mxu0 %v2015
        %2218 = vmatmul.mubr.f32.gmra.mrb[0].mxu0 %v2014
        %v2219 = vpop.f32.mrb[0].mxu0
        %v2220 = vadd.f32 0.0, %v2219
        %v2221 = vpop.f32.mrb[0].mxu0
        %2222 = vmatprep.mubr.f32.mxu0 %v2017
        %2223 = vmatmul.mubr.f32.gmra.mrb[0].mxu0 %v2016
        %v2224 = vpop.f32.mrb[0].mxu0
        %v2225 = vadd.f32 0.0, %v2224
        %v2226 = vpop.f32.mrb[0].mxu0
        %2227 = vmatprep.mubr.f32.mxu0 %v2019
        %2228 = vmatmul.mubr.f32.gmra.mrb[0].mxu0 %v2018
        %v2229 = vpop.f32.mrb[0].mxu0
        %v2230 = vadd.f32 0.0, %v2229
        %v2231 = vpop.f32.mrb[0].mxu0
        %2232 = vmatprep.mubr.f32.mxu0 %v2021
        %2233 = vmatmul.mubr.f32.gmra.mrb[0].mxu0 %v2020
        %v2234 = vpop.f32.mrb[0].mxu0
        %v2235 = vadd.f32 0.0, %v2234
        %v2236 = vpop.f32.mrb[0].mxu0
        %2237 = vmatprep.mubr.f32.mxu0 %v2023
        %2238 = vmatmul.mubr.f32.gmra.mrb[0].mxu0 %v2022
        %v2239 = vpop.f32.mrb[0].mxu0
        %v2240 = vadd.f32 0.0, %v2239
        %v2241 = vpop.f32.mrb[0].mxu0
        %2242 = vmatprep.mubr.f32.mxu0 %v2025
        %2243 = vmatmul.mubr.f32.gmra.mrb[0].mxu0 %v2024
        %v2244 = vpop.f32.mrb[0].mxu0
        %v2245 = vadd.f32 0.0, %v2244
        %v2246 = vpop.f32.mrb[0].mxu0
        %2247 = vmatprep.mubr.f32.mxu0 %v2027
        %2248 = vmatmul.mubr.f32.gmra.mrb[0].mxu0 %v2026
        %v2249 = vpop.f32.mrb[0].mxu0
        %v2250 = vadd.f32 0.0, %v2249
        %v2251 = vpop.f32.mrb[0].mxu0
        %2252 = vdwg.mxu0
        %2253 = vst.msk [vmem:[%s163] sm:$0xff] %vm966, %v2095
        %2254 = vst.msk [vmem:[%s163 + $0x8] sm:$0xff] %vm966, %v2100
        %2255 = vst.msk [vmem:[%s163 + $0x10] sm:$0xff] %vm966, %v2105
        %2256 = vst.msk [vmem:[%s163 + $0x18] sm:$0xff] %vm966, %v2110
        %2257 = vst.msk [vmem:[%s163 + $0x20] sm:$0xff] %vm966, %v2115
        %2258 = vst.msk [vmem:[%s163 + $0x28] sm:$0xff] %vm966, %v2120
        %2259 = vst.msk [vmem:[%s163 + $0x30] sm:$0xff] %vm966, %v2125
        %2260 = vst.msk [vmem:[%s163 + $0x38] sm:$0xff] %vm966, %v2130
        %2261 = vst.msk [vmem:[%s163 + $0x40] sm:$0xff] %vm966, %v2135
        %2262 = vst.msk [vmem:[%s163 + $0x48] sm:$0xff] %vm966, %v2140
        %2263 = vst.msk [vmem:[%s163 + $0x50] sm:$0xff] %vm966, %v2145
        %2264 = vst.msk [vmem:[%s163 + $0x58] sm:$0xff] %vm966, %v2150
        %2265 = vst.msk [vmem:[%s163 + $0x60] sm:$0xff] %vm966, %v2155
        %2266 = vst.msk [vmem:[%s163 + $0x68] sm:$0xff] %vm966, %v2160
        %2267 = vst.msk [vmem:[%s163 + $0x70] sm:$0xff] %vm966, %v2165
        %2268 = vst.msk [vmem:[%s163 + $0x78] sm:$0xff] %vm966, %v2170
        %2269 = vst.msk [vmem:[%s163 + $0x80] sm:$0xff] %vm966, %v2175
        %2270 = vst.msk [vmem:[%s163 + $0x88] sm:$0xff] %vm966, %v2180
        %2271 = vst.msk [vmem:[%s163 + $0x90] sm:$0xff] %vm966, %v2185
        %2272 = vst.msk [vmem:[%s163 + $0x98] sm:$0xff] %vm966, %v2190
        %2273 = vst.msk [vmem:[%s163 + $0xa0] sm:$0xff] %vm966, %v2195
        %2274 = vst.msk [vmem:[%s163 + $0xa8] sm:$0xff] %vm966, %v2200
        %2275 = vst.msk [vmem:[%s163 + $0xb0] sm:$0xff] %vm966, %v2205
        %2276 = vst.msk [vmem:[%s163 + $0xb8] sm:$0xff] %vm966, %v2210
        %2277 = vst.msk [vmem:[%s163 + $0xc0] sm:$0xff] %vm966, %v2215
        %2278 = vst.msk [vmem:[%s163 + $0xc8] sm:$0xff] %vm966, %v2220
        %2279 = vst.msk [vmem:[%s163 + $0xd0] sm:$0xff] %vm966, %v2225
        %2280 = vst.msk [vmem:[%s163 + $0xd8] sm:$0xff] %vm966, %v2230
        %2281 = vst.msk [vmem:[%s163 + $0xe0] sm:$0xff] %vm966, %v2235
        %2282 = vst.msk [vmem:[%s163 + $0xe8] sm:$0xff] %vm966, %v2240
        %2283 = vst.msk [vmem:[%s163 + $0xf0] sm:$0xff] %vm966, %v2245
        %2284 = vst.msk [vmem:[%s163 + $0xf8] sm:$0xff] %vm966, %v2250
        %p2285 = scmp.lt.s32.totalorder %s16, 1
        %s2286 = scalar_select %p2285, %s16, 1
        %s2287 = smul.addr %s2286, 32
        %s2288 = smul.addr %s2287, 8
        %s2289 = scalar_lea.vmem %s2, %s2288
        // Predicated region
        $region33: #{tpu_custom_call.1} parent=27 // pred_check
          %p2290 = pneg %p81
        $region34: #{tpu_custom_call.1} parent=27 // pred_check_branch
          %2292 = sbr.rel (%p2290) target = $region36
        $region35: #{tpu_custom_call.1} parent=27 // pred_region
          _
        $region36: #{tpu_custom_call.1} parent=27 // pred_fallthru
          _
      $region28: #{tpu_custom_call.1} parent=5 // pred_fallthru
        _
      %p2293 = scmp.le.s32.totalorder 2, %s11
      // Predicated region
      $region37: #{tpu_custom_call.1} parent=5 // pred_check
        %p2294 = pneg %p2293
      $region38: #{tpu_custom_call.1} parent=5 // pred_check_branch
        %2296 = sbr.rel (%p2294) target = $region40
      $region39: #{tpu_custom_call.1} parent=5 // pred_region
        %s2297 = ssub.s32 %s11, 2
        // Predicated region
        $region41: #{tpu_custom_call.1} parent=39 // pred_check
          %p2298 = pneg %p87
        $region42: #{tpu_custom_call.1} parent=39 // pred_check_branch
          %2300 = sbr.rel (%p2298) target = $region44
        $region43: #{tpu_custom_call.1} parent=39 // pred_region
          %p2301 = scmp.lt.s32.totalorder %s17, 1
          %s2302 = scalar_select %p2301, %s17, 1
          %s2303 = smul.addr %s2302, 32
          %s2304 = smul.addr %s2303, 8
          %s2305 = scalar_lea.vmem %s2, %s2304
        $region44: #{tpu_custom_call.1} parent=39 // pred_fallthru
          _
      $region40: #{tpu_custom_call.1} parent=5 // pred_fallthru
        _
    $region6: #{tpu_custom_call.1} parent=1 // loop_footer
      %s15 = sadd.s32 1, %s11
    $region7: #{tpu_custom_call.1} parent=1 // loop_footer_branch
      %10 = sbr.rel target = $region3
    $region8: #{tpu_custom_call.1} parent=1 // loop_exit
      _
    %2306 = vsyncpa [#allocation3], 1
    %s2307 = scalar_lea.sflag [#allocation3], 1
    %2308 = vsyncpa %s2307, 1

</llo_original>
